<compile_context>
chip_gen: v5e
topology: v5e:2x2
jax: 0.10.0
libtpu: 0.0.40
codegen_flags: <defaults>
</compile_context>

<pallas_src>
import functools

import jax
import jax.numpy as jnp
from jax.experimental import pallas as pl
from jax.experimental.pallas import tpu as pltpu


# ----------------------------------------------------------------------------
# In-kernel helpers (pure jnp on values; everything stays in VMEM/vregs)
# ----------------------------------------------------------------------------
def _shift_lanes(a, off, n):
    """result[:, i] = a[:, i + off]; ends zero-filled.

    Implemented with static slices + lane concat (robustly supported by
    Mosaic).  Spatial-boundary correctness is enforced by the tap masks /
    pooling selection, not here.
    """
    if off == 0:
        return a
    c = a.shape[0]
    z = jnp.zeros((c, abs(off)), jnp.float32)
    if off > 0:
        return jnp.concatenate([a[:, off:], z], axis=1)
    return jnp.concatenate([z, a[:, :n + off]], axis=1)


def _conv3x3_im2col(a, w, b, masks, hh, ww, relu=True):
    """3x3 'same' conv on a flattened (Cin, hh*ww) activation.

    w:     (Cout, 9*Cin)   taps ky-major, input channels innermost
    b:     (Cout, 1)
    masks: (9, hh*ww)      1.0 where the shifted tap is in-bounds
    Returns (Cout, hh*ww) float32 — lane-dense.
    """
    n = hh * ww
    pieces = []
    t = 0
    for dy in (-1, 0, 1):
        for dx in (-1, 0, 1):
            off = dy * ww + dx
            pieces.append(_shift_lanes(a, off, n) * masks[t:t + 1, :])
            t += 1
    patches = jnp.concatenate(pieces, axis=0)             # (9*Cin, n)
    y = jnp.dot(w, patches, preferred_element_type=jnp.float32) + b
    return jnp.maximum(y, 0.0) if relu else y


# ----------------------------------------------------------------------------
# Fused Pallas kernel: whole Unet forward for one batch element
# ----------------------------------------------------------------------------
def _fused_unet_kernel(x_ref, maskf_ref, maskh_ref, spool_ref, up_ref,
                       w1_ref, b1_ref, w2_ref, b2_ref, wd_ref, bd_ref,
                       wh_ref, bh_ref, logit_ref, proba_ref, *, H, W):
    HW = H * W
    H2, W2 = H // 2, W // 2

    x = x_ref[0].astype(jnp.float32)                      # (Cin, HW)
    maskf = maskf_ref[...]                                # (9, HW)
    maskh = maskh_ref[...]                                # (9, HW//4)

    # ---- encoder stage 1 (full res) ----
    e1 = _conv3x3_im2col(x, w1_ref[...], b1_ref[...], maskf, H, W)        # (C1, HW)

    # ---- 2x2 max pool: neighbour maxes + even-(h,w) selection matmul ----
    m = jnp.maximum(e1, _shift_lanes(e1, 1, HW))
    m = jnp.maximum(m, _shift_lanes(m, W, HW))
    p1 = jnp.dot(m, spool_ref[...], preferred_element_type=jnp.float32)   # (C1, HW/4)

    # ---- encoder stage 2 (half res) ----
    e2 = _conv3x3_im2col(p1, w2_ref[...], b2_ref[...], maskh, H2, W2)     # (C2, HW/4)

    # ---- nearest 2x upsample (selection matmul) + skip concat (VMEM only) ----
    u2 = jnp.dot(e2, up_ref[...], preferred_element_type=jnp.float32)     # (C2, HW)
    dec_in = jnp.concatenate([u2, e1], axis=0)                            # (C2+C1, HW)

    # ---- decoder conv (full res) ----
    d1 = _conv3x3_im2col(dec_in, wd_ref[...], bd_ref[...], maskf, H, W)   # (C1, HW)

    # ---- 1x1 segmentation head + sigmoid, two lane-dense stores ----
    logits = jnp.dot(wh_ref[...], d1,
                     preferred_element_type=jnp.float32) + bh_ref[...]    # (OUT, HW)
    logit_ref[0] = logits.astype(logit_ref.dtype)
    proba_ref[0] = jax.nn.sigmoid(logits).astype(proba_ref.dtype)


# ----------------------------------------------------------------------------
# Host-side constant builders (boundary masks, pool/upsample selection mats)
# ----------------------------------------------------------------------------
def _conv_masks(h, w):
    hh = jnp.arange(h)
    ww = jnp.arange(w)
    rows = []
    for dy in (-1, 0, 1):
        for dx in (-1, 0, 1):
            mh = (hh + dy >= 0) & (hh + dy < h)
            mw = (ww + dx >= 0) & (ww + dx < w)
            rows.append((mh[:, None] & mw[None, :]).reshape(h * w))
    return jnp.stack(rows).astype(jnp.float32)            # (9, h*w)


def _pool_select(h, w):
    h2, w2 = h // 2, w // 2
    src = ((jnp.arange(h2) * 2)[:, None] * w
           + (jnp.arange(w2) * 2)[None, :]).reshape(-1)   # pooled -> source idx
    return jax.nn.one_hot(src, h * w, dtype=jnp.float32).T   # (h*w, h2*w2)


def _upsample_select(h, w):
    h2, w2 = h // 2, w // 2
    src = ((jnp.arange(h) // 2)[:, None] * w2
           + (jnp.arange(w) // 2)[None, :]).reshape(-1)   # full -> source idx
    return jax.nn.one_hot(src, h2 * w2, dtype=jnp.float32).T  # (h2*w2, h*w)


def _flat_conv_weight(w_hwio):
    """(3,3,Cin,Cout) HWIO -> (Cout, 9*Cin), taps ky-major, channels inner."""
    cout = w_hwio.shape[-1]
    return jnp.transpose(w_hwio, (3, 0, 1, 2)).reshape(cout, -1)


# ----------------------------------------------------------------------------
# The SMP_Model equivalent
# ----------------------------------------------------------------------------
def init_params(key, in_channels, c1, c2, out_classes):
    ks = jax.random.split(key, 8)
    scale = 0.1
    return {
        "enc1_w": scale * jax.random.normal(ks[0], (3, 3, in_channels, c1), jnp.float32),
        "enc1_b": scale * jax.random.normal(ks[1], (c1,), jnp.float32),
        "enc2_w": scale * jax.random.normal(ks[2], (3, 3, c1, c2), jnp.float32),
        "enc2_b": scale * jax.random.normal(ks[3], (c2,), jnp.float32),
        "dec_w":  scale * jax.random.normal(ks[4], (3, 3, c2 + c1, c1), jnp.float32),
        "dec_b":  scale * jax.random.normal(ks[5], (c1,), jnp.float32),
        "head_w": scale * jax.random.normal(ks[6], (c1, out_classes), jnp.float32),
        "head_b": scale * jax.random.normal(ks[7], (out_classes,), jnp.float32),
    }


def smp_model_forward(params, batch):
    """batch: {'image': (N, C, H, W) float32} -> {'prediction', 'proba'} in NCHW."""
    x_nchw = batch["image"]
    n, cin, h, w = x_nchw.shape
    hw, hw4 = h * w, (h // 2) * (w // 2)

    c1 = params["enc1_w"].shape[-1]
    c2 = params["enc2_w"].shape[-1]
    out_classes = params["head_w"].shape[-1]

    # NCHW is already channels-first; flattening H*W onto the lane axis is a
    # free contiguous reshape — no transposes anywhere in the wrapper.
    x_flat = x_nchw.reshape(n, cin, hw)

    maskf = _conv_masks(h, w)
    maskh = _conv_masks(h // 2, w // 2)
    spool = _pool_select(h, w)
    upsel = _upsample_select(h, w)

    w1 = _flat_conv_weight(params["enc1_w"]); b1 = params["enc1_b"].reshape(c1, 1)
    w2 = _flat_conv_weight(params["enc2_w"]); b2 = params["enc2_b"].reshape(c2, 1)
    wd = _flat_conv_weight(params["dec_w"]);  bd = params["dec_b"].reshape(c1, 1)
    wh = params["head_w"].T;                  bh = params["head_b"].reshape(out_classes, 1)

    flops_per_img = (2 * hw * (9 * cin) * c1 + 2 * hw4 * (9 * c1) * c2
                     + 2 * hw * (9 * (c1 + c2)) * c1 + 2 * hw * c1 * out_classes
                     + 2 * hw * hw4 + 2 * hw4 * hw)
    cost = pl.CostEstimate(
        flops=int(n * flops_per_img),
        transcendentals=int(n * out_classes * hw),
        bytes_accessed=int(4 * (x_flat.size + 2 * n * out_classes * hw
                                + w1.size + w2.size + wd.size + wh.size)))

    def const2d(shape):
        return pl.BlockSpec(shape, lambda i: (0, 0))

    logits_f, proba_f = pl.pallas_call(
        functools.partial(_fused_unet_kernel, H=h, W=w),
        out_shape=(
            jax.ShapeDtypeStruct((n, out_classes, hw), x_nchw.dtype),
            jax.ShapeDtypeStruct((n, out_classes, hw), x_nchw.dtype),
        ),
        grid=(n,),
        in_specs=[
            pl.BlockSpec((1, cin, hw), lambda i: (i, 0, 0)),   # image
            const2d((9, hw)),                                  # full-res tap masks
            const2d((9, hw4)),                                 # half-res tap masks
            const2d((hw, hw4)),                                # pool selection
            const2d((hw4, hw)),                                # upsample selection
            const2d((c1, 9 * cin)),  const2d((c1, 1)),         # enc1
            const2d((c2, 9 * c1)),   const2d((c2, 1)),         # enc2
            const2d((c1, 9 * (c1 + c2))), const2d((c1, 1)),    # dec
            const2d((out_classes, c1)),   const2d((out_classes, 1)),  # head
        ],
        out_specs=(
            pl.BlockSpec((1, out_classes, hw), lambda i: (i, 0, 0)),
            pl.BlockSpec((1, out_classes, hw), lambda i: (i, 0, 0)),
        ),
        compiler_params=pltpu.CompilerParams(
            dimension_semantics=("parallel",)),
        cost_estimate=cost,
    )(x_flat, maskf, maskh, spool, upsel, w1, b1, w2, b2, wd, bd, wh, bh)

    return {
        "prediction": logits_f.reshape(n, out_classes, h, w),
        "proba": proba_f.reshape(n, out_classes, h, w),
    }


# ----------------------------------------------------------------------------
# Pure-JAX reference (correctness check only)
# ----------------------------------------------------------------------------
def _ref_conv3x3(x, w, b, relu):
    y = jax.lax.conv_general_dilated(
        x, w, window_strides=(1, 1), padding="SAME",
        dimension_numbers=("NHWC", "HWIO", "NHWC"),
        precision=jax.lax.Precision.HIGHEST) + b
    return jnp.maximum(y, 0.0) if relu else y


def _ref_maxpool2x2(x):
    n, h, w, c = x.shape
    return x.reshape(n, h // 2, 2, w // 2, 2, c).max(axis=(2, 4))


def _ref_upsample2x(x):
    return jnp.repeat(jnp.repeat(x, 2, axis=1), 2, axis=2)


def smp_model_reference(params, batch):
    x = jnp.transpose(batch["image"], (0, 2, 3, 1))
    e1 = _ref_conv3x3(x, params["enc1_w"], params["enc1_b"], True)
    p1 = _ref_maxpool2x2(e1)
    e2 = _ref_conv3x3(p1, params["enc2_w"], params["enc2_b"], True)
    u2 = _ref_upsample2x(e2)
    d1 = _ref_conv3x3(jnp.concatenate([u2, e1], axis=-1),
                      params["dec_w"], params["dec_b"], True)
    logits = jnp.einsum("nhwc,co->nhwo", d1, params["head_w"],
                        precision=jax.lax.Precision.HIGHEST) + params["head_b"]
    return {
        "prediction": jnp.transpose(logits, (0, 3, 1, 2)),
        "proba": jnp.transpose(jax.nn.sigmoid(logits), (0, 3, 1, 2)),
    }


if __name__ == "__main__":
    key = jax.random.PRNGKey(0)
    k_param, k_img = jax.random.split(key)

    # Small shapes consistent with the module's forward: NCHW image input.
    N, IN_CH, H, W = 2, 3, 16, 16
    C1, C2, OUT_CLASSES = 8, 16, 2

    params = init_params(k_param, IN_CH, C1, C2, OUT_CLASSES)
    image = jax.random.normal(k_img, (N, IN_CH, H, W), jnp.float32)
    batch = {"image": image}

    out = smp_model_forward(params, batch)
    out = jax.block_until_ready(out)

    ref = smp_model_reference(params, batch)
    assert out["prediction"].shape == (N, OUT_CLASSES, H, W)
    assert out["proba"].shape == (N, OUT_CLASSES, H, W)
    assert jnp.allclose(out["prediction"], ref["prediction"], atol=1e-4, rtol=1e-4)
    assert jnp.allclose(out["proba"], ref["proba"], atol=1e-5, rtol=1e-4)

    print("KERNEL_OK")
</pallas_src>

<mosaic_0001>
module attributes {stable_mosaic.version = 11 : i64} {
  func.func @_fused_unet_kernel(%arg0: i32, %arg1: memref<1x3x256xf32, #tpu.memory_space<vmem>>, %arg2: memref<9x256xf32, #tpu.memory_space<vmem>>, %arg3: memref<9x64xf32, #tpu.memory_space<vmem>>, %arg4: memref<256x64xf32, #tpu.memory_space<vmem>>, %arg5: memref<64x256xf32, #tpu.memory_space<vmem>>, %arg6: memref<8x27xf32, #tpu.memory_space<vmem>>, %arg7: memref<8x1xf32, #tpu.memory_space<vmem>>, %arg8: memref<16x72xf32, #tpu.memory_space<vmem>>, %arg9: memref<16x1xf32, #tpu.memory_space<vmem>>, %arg10: memref<8x216xf32, #tpu.memory_space<vmem>>, %arg11: memref<8x1xf32, #tpu.memory_space<vmem>>, %arg12: memref<2x8xf32, #tpu.memory_space<vmem>>, %arg13: memref<2x1xf32, #tpu.memory_space<vmem>>, %arg14: memref<1x2x256xf32, #tpu.memory_space<vmem>>, %arg15: memref<1x2x256xf32, #tpu.memory_space<vmem>>) attributes {dimension_semantics = [#tpu.dimension_semantics<parallel>], iteration_bounds = array<i64: 2>, scalar_prefetch = 0 : i64, scratch_operands = 0 : i64, tpu.core_type = #tpu.core_type<tc>, window_params = [{transform_indices = @transform_0, window_bounds = array<i64: 1, 3, 256>}, {pipeline_mode = #tpu.pipeline_mode<synchronous>, transform_indices = @transform_1, window_bounds = array<i64: 9, 256>}, {pipeline_mode = #tpu.pipeline_mode<synchronous>, transform_indices = @transform_2, window_bounds = array<i64: 9, 64>}, {pipeline_mode = #tpu.pipeline_mode<synchronous>, transform_indices = @transform_3, window_bounds = array<i64: 256, 64>}, {pipeline_mode = #tpu.pipeline_mode<synchronous>, transform_indices = @transform_4, window_bounds = array<i64: 64, 256>}, {pipeline_mode = #tpu.pipeline_mode<synchronous>, transform_indices = @transform_5, window_bounds = array<i64: 8, 27>}, {pipeline_mode = #tpu.pipeline_mode<synchronous>, transform_indices = @transform_6, window_bounds = array<i64: 8, 1>}, {pipeline_mode = #tpu.pipeline_mode<synchronous>, transform_indices = @transform_7, window_bounds = array<i64: 16, 72>}, {pipeline_mode = #tpu.pipeline_mode<synchronous>, transform_indices = @transform_8, window_bounds = array<i64: 16, 1>}, {pipeline_mode = #tpu.pipeline_mode<synchronous>, transform_indices = @transform_9, window_bounds = array<i64: 8, 216>}, {pipeline_mode = #tpu.pipeline_mode<synchronous>, transform_indices = @transform_10, window_bounds = array<i64: 8, 1>}, {pipeline_mode = #tpu.pipeline_mode<synchronous>, transform_indices = @transform_11, window_bounds = array<i64: 2, 8>}, {pipeline_mode = #tpu.pipeline_mode<synchronous>, transform_indices = @transform_12, window_bounds = array<i64: 2, 1>}, {transform_indices = @transform_13, window_bounds = array<i64: 1, 2, 256>}, {transform_indices = @transform_14, window_bounds = array<i64: 1, 2, 256>}]} {
    %c0 = arith.constant 0 : index
    %c0_0 = arith.constant 0 : index
    %c0_1 = arith.constant 0 : index
    %0 = vector.load %arg1[%c0, %c0_0, %c0_1] : memref<1x3x256xf32, #tpu.memory_space<vmem>>, vector<1x3x256xf32>
    %1 = vector.shape_cast %0 : vector<1x3x256xf32> to vector<3x256xf32>
    %c0_2 = arith.constant 0 : index
    %c0_3 = arith.constant 0 : index
    %2 = vector.load %arg2[%c0_2, %c0_3] : memref<9x256xf32, #tpu.memory_space<vmem>>, vector<9x256xf32>
    %c0_4 = arith.constant 0 : index
    %c0_5 = arith.constant 0 : index
    %3 = vector.load %arg3[%c0_4, %c0_5] : memref<9x64xf32, #tpu.memory_space<vmem>>, vector<9x64xf32>
    %c0_6 = arith.constant 0 : index
    %c0_7 = arith.constant 0 : index
    %4 = vector.load %arg6[%c0_6, %c0_7] : memref<8x27xf32, #tpu.memory_space<vmem>>, vector<8x27xf32>
    %c0_8 = arith.constant 0 : index
    %c0_9 = arith.constant 0 : index
    %5 = vector.load %arg7[%c0_8, %c0_9] : memref<8x1xf32, #tpu.memory_space<vmem>>, vector<8x1xf32>
    %cst = arith.constant 0.000000e+00 : f32
    %6 = vector.broadcast %cst : f32 to vector<3x17xf32>
    %7 = vector.extract_strided_slice %1 {offsets = [0, 0], sizes = [3, 239], strides = [1, 1]} : vector<3x256xf32> to vector<3x239xf32>
    %8 = tpu.concatenate %6, %7 in 1 : vector<3x17xf32>, vector<3x239xf32> -> vector<3x256xf32>
    %9 = vector.extract_strided_slice %2 {offsets = [0, 0], sizes = [1, 256], strides = [1, 1]} : vector<9x256xf32> to vector<1x256xf32>
    %10 = vector.broadcast %9 : vector<1x256xf32> to vector<3x256xf32>
    %11 = arith.mulf %8, %10 : vector<3x256xf32>
    %cst_10 = arith.constant 0.000000e+00 : f32
    %12 = vector.broadcast %cst_10 : f32 to vector<3x16xf32>
    %13 = vector.extract_strided_slice %1 {offsets = [0, 0], sizes = [3, 240], strides = [1, 1]} : vector<3x256xf32> to vector<3x240xf32>
    %14 = tpu.concatenate %12, %13 in 1 : vector<3x16xf32>, vector<3x240xf32> -> vector<3x256xf32>
    %15 = vector.extract_strided_slice %2 {offsets = [1, 0], sizes = [1, 256], strides = [1, 1]} : vector<9x256xf32> to vector<1x256xf32>
    %16 = vector.broadcast %15 : vector<1x256xf32> to vector<3x256xf32>
    %17 = arith.mulf %14, %16 : vector<3x256xf32>
    %cst_11 = arith.constant 0.000000e+00 : f32
    %18 = vector.broadcast %cst_11 : f32 to vector<3x15xf32>
    %19 = vector.extract_strided_slice %1 {offsets = [0, 0], sizes = [3, 241], strides = [1, 1]} : vector<3x256xf32> to vector<3x241xf32>
    %20 = tpu.concatenate %18, %19 in 1 : vector<3x15xf32>, vector<3x241xf32> -> vector<3x256xf32>
    %21 = vector.extract_strided_slice %2 {offsets = [2, 0], sizes = [1, 256], strides = [1, 1]} : vector<9x256xf32> to vector<1x256xf32>
    %22 = vector.broadcast %21 : vector<1x256xf32> to vector<3x256xf32>
    %23 = arith.mulf %20, %22 : vector<3x256xf32>
    %cst_12 = arith.constant 0.000000e+00 : f32
    %24 = vector.broadcast %cst_12 : f32 to vector<3x1xf32>
    %25 = vector.extract_strided_slice %1 {offsets = [0, 0], sizes = [3, 255], strides = [1, 1]} : vector<3x256xf32> to vector<3x255xf32>
    %26 = tpu.concatenate %24, %25 in 1 : vector<3x1xf32>, vector<3x255xf32> -> vector<3x256xf32>
    %27 = vector.extract_strided_slice %2 {offsets = [3, 0], sizes = [1, 256], strides = [1, 1]} : vector<9x256xf32> to vector<1x256xf32>
    %28 = vector.broadcast %27 : vector<1x256xf32> to vector<3x256xf32>
    %29 = arith.mulf %26, %28 : vector<3x256xf32>
    %30 = vector.extract_strided_slice %2 {offsets = [4, 0], sizes = [1, 256], strides = [1, 1]} : vector<9x256xf32> to vector<1x256xf32>
    %31 = vector.broadcast %30 : vector<1x256xf32> to vector<3x256xf32>
    %32 = arith.mulf %1, %31 : vector<3x256xf32>
    %cst_13 = arith.constant 0.000000e+00 : f32
    %33 = vector.broadcast %cst_13 : f32 to vector<3x1xf32>
    %34 = vector.extract_strided_slice %1 {offsets = [0, 1], sizes = [3, 255], strides = [1, 1]} : vector<3x256xf32> to vector<3x255xf32>
    %35 = tpu.concatenate %34, %33 in 1 : vector<3x255xf32>, vector<3x1xf32> -> vector<3x256xf32>
    %36 = vector.extract_strided_slice %2 {offsets = [5, 0], sizes = [1, 256], strides = [1, 1]} : vector<9x256xf32> to vector<1x256xf32>
    %37 = vector.broadcast %36 : vector<1x256xf32> to vector<3x256xf32>
    %38 = arith.mulf %35, %37 : vector<3x256xf32>
    %cst_14 = arith.constant 0.000000e+00 : f32
    %39 = vector.broadcast %cst_14 : f32 to vector<3x15xf32>
    %40 = vector.extract_strided_slice %1 {offsets = [0, 15], sizes = [3, 241], strides = [1, 1]} : vector<3x256xf32> to vector<3x241xf32>
    %41 = tpu.concatenate %40, %39 in 1 : vector<3x241xf32>, vector<3x15xf32> -> vector<3x256xf32>
    %42 = vector.extract_strided_slice %2 {offsets = [6, 0], sizes = [1, 256], strides = [1, 1]} : vector<9x256xf32> to vector<1x256xf32>
    %43 = vector.broadcast %42 : vector<1x256xf32> to vector<3x256xf32>
    %44 = arith.mulf %41, %43 : vector<3x256xf32>
    %cst_15 = arith.constant 0.000000e+00 : f32
    %45 = vector.broadcast %cst_15 : f32 to vector<3x16xf32>
    %46 = vector.extract_strided_slice %1 {offsets = [0, 16], sizes = [3, 240], strides = [1, 1]} : vector<3x256xf32> to vector<3x240xf32>
    %47 = tpu.concatenate %46, %45 in 1 : vector<3x240xf32>, vector<3x16xf32> -> vector<3x256xf32>
    %48 = vector.extract_strided_slice %2 {offsets = [7, 0], sizes = [1, 256], strides = [1, 1]} : vector<9x256xf32> to vector<1x256xf32>
    %49 = vector.broadcast %48 : vector<1x256xf32> to vector<3x256xf32>
    %50 = arith.mulf %47, %49 : vector<3x256xf32>
    %cst_16 = arith.constant 0.000000e+00 : f32
    %51 = vector.broadcast %cst_16 : f32 to vector<3x17xf32>
    %52 = vector.extract_strided_slice %1 {offsets = [0, 17], sizes = [3, 239], strides = [1, 1]} : vector<3x256xf32> to vector<3x239xf32>
    %53 = tpu.concatenate %52, %51 in 1 : vector<3x239xf32>, vector<3x17xf32> -> vector<3x256xf32>
    %54 = vector.extract_strided_slice %2 {offsets = [8, 0], sizes = [1, 256], strides = [1, 1]} : vector<9x256xf32> to vector<1x256xf32>
    %55 = vector.broadcast %54 : vector<1x256xf32> to vector<3x256xf32>
    %56 = arith.mulf %53, %55 : vector<3x256xf32>
    %57 = tpu.concatenate %11, %17, %23, %29, %32, %38, %44, %50, %56 in 0 : vector<3x256xf32>, vector<3x256xf32>, vector<3x256xf32>, vector<3x256xf32>, vector<3x256xf32>, vector<3x256xf32>, vector<3x256xf32>, vector<3x256xf32>, vector<3x256xf32> -> vector<27x256xf32>
    %cst_17 = arith.constant dense<0.000000e+00> : vector<8x256xf32>
    %58 = tpu.matmul %4, %57, %cst_17 {dimension_numbers = #tpu.dot_dimension_numbers<[1], [0], [0], [1], [0, 0, 1, 1], [], []>} : vector<8x27xf32>, vector<27x256xf32>, vector<8x256xf32> -> vector<8x256xf32>
    %59 = vector.broadcast %5 : vector<8x1xf32> to vector<8x256xf32>
    %60 = arith.addf %58, %59 : vector<8x256xf32>
    %cst_18 = arith.constant 0.000000e+00 : f32
    %61 = vector.broadcast %cst_18 : f32 to vector<8x256xf32>
    %62 = arith.maximumf %60, %61 : vector<8x256xf32>
    %cst_19 = arith.constant 0.000000e+00 : f32
    %63 = vector.broadcast %cst_19 : f32 to vector<8x1xf32>
    %64 = vector.extract_strided_slice %62 {offsets = [0, 1], sizes = [8, 255], strides = [1, 1]} : vector<8x256xf32> to vector<8x255xf32>
    %65 = tpu.concatenate %64, %63 in 1 : vector<8x255xf32>, vector<8x1xf32> -> vector<8x256xf32>
    %66 = arith.maximumf %62, %65 : vector<8x256xf32>
    %cst_20 = arith.constant 0.000000e+00 : f32
    %67 = vector.broadcast %cst_20 : f32 to vector<8x16xf32>
    %68 = vector.extract_strided_slice %66 {offsets = [0, 16], sizes = [8, 240], strides = [1, 1]} : vector<8x256xf32> to vector<8x240xf32>
    %69 = tpu.concatenate %68, %67 in 1 : vector<8x240xf32>, vector<8x16xf32> -> vector<8x256xf32>
    %70 = arith.maximumf %66, %69 : vector<8x256xf32>
    %c0_21 = arith.constant 0 : index
    %c0_22 = arith.constant 0 : index
    %71 = vector.load %arg4[%c0_21, %c0_22] : memref<256x64xf32, #tpu.memory_space<vmem>>, vector<256x64xf32>
    %cst_23 = arith.constant dense<0.000000e+00> : vector<8x64xf32>
    %72 = tpu.matmul %70, %71, %cst_23 {dimension_numbers = #tpu.dot_dimension_numbers<[1], [0], [0], [1], [0, 0, 1, 1], [], []>} : vector<8x256xf32>, vector<256x64xf32>, vector<8x64xf32> -> vector<8x64xf32>
    %c0_24 = arith.constant 0 : index
    %c0_25 = arith.constant 0 : index
    %73 = vector.load %arg8[%c0_24, %c0_25] : memref<16x72xf32, #tpu.memory_space<vmem>>, vector<16x72xf32>
    %c0_26 = arith.constant 0 : index
    %c0_27 = arith.constant 0 : index
    %74 = vector.load %arg9[%c0_26, %c0_27] : memref<16x1xf32, #tpu.memory_space<vmem>>, vector<16x1xf32>
    %cst_28 = arith.constant 0.000000e+00 : f32
    %75 = vector.broadcast %cst_28 : f32 to vector<8x9xf32>
    %76 = vector.extract_strided_slice %72 {offsets = [0, 0], sizes = [8, 55], strides = [1, 1]} : vector<8x64xf32> to vector<8x55xf32>
    %77 = tpu.concatenate %75, %76 in 1 : vector<8x9xf32>, vector<8x55xf32> -> vector<8x64xf32>
    %78 = vector.extract_strided_slice %3 {offsets = [0, 0], sizes = [1, 64], strides = [1, 1]} : vector<9x64xf32> to vector<1x64xf32>
    %79 = vector.broadcast %78 : vector<1x64xf32> to vector<8x64xf32>
    %80 = arith.mulf %77, %79 : vector<8x64xf32>
    %cst_29 = arith.constant 0.000000e+00 : f32
    %81 = vector.broadcast %cst_29 : f32 to vector<8x8xf32>
    %82 = vector.extract_strided_slice %72 {offsets = [0, 0], sizes = [8, 56], strides = [1, 1]} : vector<8x64xf32> to vector<8x56xf32>
    %83 = tpu.concatenate %81, %82 in 1 : vector<8x8xf32>, vector<8x56xf32> -> vector<8x64xf32>
    %84 = vector.extract_strided_slice %3 {offsets = [1, 0], sizes = [1, 64], strides = [1, 1]} : vector<9x64xf32> to vector<1x64xf32>
    %85 = vector.broadcast %84 : vector<1x64xf32> to vector<8x64xf32>
    %86 = arith.mulf %83, %85 : vector<8x64xf32>
    %cst_30 = arith.constant 0.000000e+00 : f32
    %87 = vector.broadcast %cst_30 : f32 to vector<8x7xf32>
    %88 = vector.extract_strided_slice %72 {offsets = [0, 0], sizes = [8, 57], strides = [1, 1]} : vector<8x64xf32> to vector<8x57xf32>
    %89 = tpu.concatenate %87, %88 in 1 : vector<8x7xf32>, vector<8x57xf32> -> vector<8x64xf32>
    %90 = vector.extract_strided_slice %3 {offsets = [2, 0], sizes = [1, 64], strides = [1, 1]} : vector<9x64xf32> to vector<1x64xf32>
    %91 = vector.broadcast %90 : vector<1x64xf32> to vector<8x64xf32>
    %92 = arith.mulf %89, %91 : vector<8x64xf32>
    %cst_31 = arith.constant 0.000000e+00 : f32
    %93 = vector.broadcast %cst_31 : f32 to vector<8x1xf32>
    %94 = vector.extract_strided_slice %72 {offsets = [0, 0], sizes = [8, 63], strides = [1, 1]} : vector<8x64xf32> to vector<8x63xf32>
    %95 = tpu.concatenate %93, %94 in 1 : vector<8x1xf32>, vector<8x63xf32> -> vector<8x64xf32>
    %96 = vector.extract_strided_slice %3 {offsets = [3, 0], sizes = [1, 64], strides = [1, 1]} : vector<9x64xf32> to vector<1x64xf32>
    %97 = vector.broadcast %96 : vector<1x64xf32> to vector<8x64xf32>
    %98 = arith.mulf %95, %97 : vector<8x64xf32>
    %99 = vector.extract_strided_slice %3 {offsets = [4, 0], sizes = [1, 64], strides = [1, 1]} : vector<9x64xf32> to vector<1x64xf32>
    %100 = vector.broadcast %99 : vector<1x64xf32> to vector<8x64xf32>
    %101 = arith.mulf %72, %100 : vector<8x64xf32>
    %cst_32 = arith.constant 0.000000e+00 : f32
    %102 = vector.broadcast %cst_32 : f32 to vector<8x1xf32>
    %103 = vector.extract_strided_slice %72 {offsets = [0, 1], sizes = [8, 63], strides = [1, 1]} : vector<8x64xf32> to vector<8x63xf32>
    %104 = tpu.concatenate %103, %102 in 1 : vector<8x63xf32>, vector<8x1xf32> -> vector<8x64xf32>
    %105 = vector.extract_strided_slice %3 {offsets = [5, 0], sizes = [1, 64], strides = [1, 1]} : vector<9x64xf32> to vector<1x64xf32>
    %106 = vector.broadcast %105 : vector<1x64xf32> to vector<8x64xf32>
    %107 = arith.mulf %104, %106 : vector<8x64xf32>
    %cst_33 = arith.constant 0.000000e+00 : f32
    %108 = vector.broadcast %cst_33 : f32 to vector<8x7xf32>
    %109 = vector.extract_strided_slice %72 {offsets = [0, 7], sizes = [8, 57], strides = [1, 1]} : vector<8x64xf32> to vector<8x57xf32>
    %110 = tpu.concatenate %109, %108 in 1 : vector<8x57xf32>, vector<8x7xf32> -> vector<8x64xf32>
    %111 = vector.extract_strided_slice %3 {offsets = [6, 0], sizes = [1, 64], strides = [1, 1]} : vector<9x64xf32> to vector<1x64xf32>
    %112 = vector.broadcast %111 : vector<1x64xf32> to vector<8x64xf32>
    %113 = arith.mulf %110, %112 : vector<8x64xf32>
    %cst_34 = arith.constant 0.000000e+00 : f32
    %114 = vector.broadcast %cst_34 : f32 to vector<8x8xf32>
    %115 = vector.extract_strided_slice %72 {offsets = [0, 8], sizes = [8, 56], strides = [1, 1]} : vector<8x64xf32> to vector<8x56xf32>
    %116 = tpu.concatenate %115, %114 in 1 : vector<8x56xf32>, vector<8x8xf32> -> vector<8x64xf32>
    %117 = vector.extract_strided_slice %3 {offsets = [7, 0], sizes = [1, 64], strides = [1, 1]} : vector<9x64xf32> to vector<1x64xf32>
    %118 = vector.broadcast %117 : vector<1x64xf32> to vector<8x64xf32>
    %119 = arith.mulf %116, %118 : vector<8x64xf32>
    %cst_35 = arith.constant 0.000000e+00 : f32
    %120 = vector.broadcast %cst_35 : f32 to vector<8x9xf32>
    %121 = vector.extract_strided_slice %72 {offsets = [0, 9], sizes = [8, 55], strides = [1, 1]} : vector<8x64xf32> to vector<8x55xf32>
    %122 = tpu.concatenate %121, %120 in 1 : vector<8x55xf32>, vector<8x9xf32> -> vector<8x64xf32>
    %123 = vector.extract_strided_slice %3 {offsets = [8, 0], sizes = [1, 64], strides = [1, 1]} : vector<9x64xf32> to vector<1x64xf32>
    %124 = vector.broadcast %123 : vector<1x64xf32> to vector<8x64xf32>
    %125 = arith.mulf %122, %124 : vector<8x64xf32>
    %126 = tpu.concatenate %80, %86, %92, %98, %101, %107, %113, %119, %125 in 0 : vector<8x64xf32>, vector<8x64xf32>, vector<8x64xf32>, vector<8x64xf32>, vector<8x64xf32>, vector<8x64xf32>, vector<8x64xf32>, vector<8x64xf32>, vector<8x64xf32> -> vector<72x64xf32>
    %cst_36 = arith.constant dense<0.000000e+00> : vector<16x64xf32>
    %127 = tpu.matmul %73, %126, %cst_36 {dimension_numbers = #tpu.dot_dimension_numbers<[1], [0], [0], [1], [0, 0, 1, 1], [], []>} : vector<16x72xf32>, vector<72x64xf32>, vector<16x64xf32> -> vector<16x64xf32>
    %128 = vector.broadcast %74 : vector<16x1xf32> to vector<16x64xf32>
    %129 = arith.addf %127, %128 : vector<16x64xf32>
    %cst_37 = arith.constant 0.000000e+00 : f32
    %130 = vector.broadcast %cst_37 : f32 to vector<16x64xf32>
    %131 = arith.maximumf %129, %130 : vector<16x64xf32>
    %c0_38 = arith.constant 0 : index
    %c0_39 = arith.constant 0 : index
    %132 = vector.load %arg5[%c0_38, %c0_39] : memref<64x256xf32, #tpu.memory_space<vmem>>, vector<64x256xf32>
    %cst_40 = arith.constant dense<0.000000e+00> : vector<16x256xf32>
    %133 = tpu.matmul %131, %132, %cst_40 {dimension_numbers = #tpu.dot_dimension_numbers<[1], [0], [0], [1], [0, 0, 1, 1], [], []>} : vector<16x64xf32>, vector<64x256xf32>, vector<16x256xf32> -> vector<16x256xf32>
    %134 = tpu.concatenate %133, %62 in 0 : vector<16x256xf32>, vector<8x256xf32> -> vector<24x256xf32>
    %c0_41 = arith.constant 0 : index
    %c0_42 = arith.constant 0 : index
    %135 = vector.load %arg10[%c0_41, %c0_42] : memref<8x216xf32, #tpu.memory_space<vmem>>, vector<8x216xf32>
    %c0_43 = arith.constant 0 : index
    %c0_44 = arith.constant 0 : index
    %136 = vector.load %arg11[%c0_43, %c0_44] : memref<8x1xf32, #tpu.memory_space<vmem>>, vector<8x1xf32>
    %cst_45 = arith.constant 0.000000e+00 : f32
    %137 = vector.broadcast %cst_45 : f32 to vector<24x17xf32>
    %138 = vector.extract_strided_slice %134 {offsets = [0, 0], sizes = [24, 239], strides = [1, 1]} : vector<24x256xf32> to vector<24x239xf32>
    %139 = tpu.concatenate %137, %138 in 1 : vector<24x17xf32>, vector<24x239xf32> -> vector<24x256xf32>
    %140 = vector.extract_strided_slice %2 {offsets = [0, 0], sizes = [1, 256], strides = [1, 1]} : vector<9x256xf32> to vector<1x256xf32>
    %141 = vector.broadcast %140 : vector<1x256xf32> to vector<24x256xf32>
    %142 = arith.mulf %139, %141 : vector<24x256xf32>
    %cst_46 = arith.constant 0.000000e+00 : f32
    %143 = vector.broadcast %cst_46 : f32 to vector<24x16xf32>
    %144 = vector.extract_strided_slice %134 {offsets = [0, 0], sizes = [24, 240], strides = [1, 1]} : vector<24x256xf32> to vector<24x240xf32>
    %145 = tpu.concatenate %143, %144 in 1 : vector<24x16xf32>, vector<24x240xf32> -> vector<24x256xf32>
    %146 = vector.extract_strided_slice %2 {offsets = [1, 0], sizes = [1, 256], strides = [1, 1]} : vector<9x256xf32> to vector<1x256xf32>
    %147 = vector.broadcast %146 : vector<1x256xf32> to vector<24x256xf32>
    %148 = arith.mulf %145, %147 : vector<24x256xf32>
    %cst_47 = arith.constant 0.000000e+00 : f32
    %149 = vector.broadcast %cst_47 : f32 to vector<24x15xf32>
    %150 = vector.extract_strided_slice %134 {offsets = [0, 0], sizes = [24, 241], strides = [1, 1]} : vector<24x256xf32> to vector<24x241xf32>
    %151 = tpu.concatenate %149, %150 in 1 : vector<24x15xf32>, vector<24x241xf32> -> vector<24x256xf32>
    %152 = vector.extract_strided_slice %2 {offsets = [2, 0], sizes = [1, 256], strides = [1, 1]} : vector<9x256xf32> to vector<1x256xf32>
    %153 = vector.broadcast %152 : vector<1x256xf32> to vector<24x256xf32>
    %154 = arith.mulf %151, %153 : vector<24x256xf32>
    %cst_48 = arith.constant 0.000000e+00 : f32
    %155 = vector.broadcast %cst_48 : f32 to vector<24x1xf32>
    %156 = vector.extract_strided_slice %134 {offsets = [0, 0], sizes = [24, 255], strides = [1, 1]} : vector<24x256xf32> to vector<24x255xf32>
    %157 = tpu.concatenate %155, %156 in 1 : vector<24x1xf32>, vector<24x255xf32> -> vector<24x256xf32>
    %158 = vector.extract_strided_slice %2 {offsets = [3, 0], sizes = [1, 256], strides = [1, 1]} : vector<9x256xf32> to vector<1x256xf32>
    %159 = vector.broadcast %158 : vector<1x256xf32> to vector<24x256xf32>
    %160 = arith.mulf %157, %159 : vector<24x256xf32>
    %161 = vector.extract_strided_slice %2 {offsets = [4, 0], sizes = [1, 256], strides = [1, 1]} : vector<9x256xf32> to vector<1x256xf32>
    %162 = vector.broadcast %161 : vector<1x256xf32> to vector<24x256xf32>
    %163 = arith.mulf %134, %162 : vector<24x256xf32>
    %cst_49 = arith.constant 0.000000e+00 : f32
    %164 = vector.broadcast %cst_49 : f32 to vector<24x1xf32>
    %165 = vector.extract_strided_slice %134 {offsets = [0, 1], sizes = [24, 255], strides = [1, 1]} : vector<24x256xf32> to vector<24x255xf32>
    %166 = tpu.concatenate %165, %164 in 1 : vector<24x255xf32>, vector<24x1xf32> -> vector<24x256xf32>
    %167 = vector.extract_strided_slice %2 {offsets = [5, 0], sizes = [1, 256], strides = [1, 1]} : vector<9x256xf32> to vector<1x256xf32>
    %168 = vector.broadcast %167 : vector<1x256xf32> to vector<24x256xf32>
    %169 = arith.mulf %166, %168 : vector<24x256xf32>
    %cst_50 = arith.constant 0.000000e+00 : f32
    %170 = vector.broadcast %cst_50 : f32 to vector<24x15xf32>
    %171 = vector.extract_strided_slice %134 {offsets = [0, 15], sizes = [24, 241], strides = [1, 1]} : vector<24x256xf32> to vector<24x241xf32>
    %172 = tpu.concatenate %171, %170 in 1 : vector<24x241xf32>, vector<24x15xf32> -> vector<24x256xf32>
    %173 = vector.extract_strided_slice %2 {offsets = [6, 0], sizes = [1, 256], strides = [1, 1]} : vector<9x256xf32> to vector<1x256xf32>
    %174 = vector.broadcast %173 : vector<1x256xf32> to vector<24x256xf32>
    %175 = arith.mulf %172, %174 : vector<24x256xf32>
    %cst_51 = arith.constant 0.000000e+00 : f32
    %176 = vector.broadcast %cst_51 : f32 to vector<24x16xf32>
    %177 = vector.extract_strided_slice %134 {offsets = [0, 16], sizes = [24, 240], strides = [1, 1]} : vector<24x256xf32> to vector<24x240xf32>
    %178 = tpu.concatenate %177, %176 in 1 : vector<24x240xf32>, vector<24x16xf32> -> vector<24x256xf32>
    %179 = vector.extract_strided_slice %2 {offsets = [7, 0], sizes = [1, 256], strides = [1, 1]} : vector<9x256xf32> to vector<1x256xf32>
    %180 = vector.broadcast %179 : vector<1x256xf32> to vector<24x256xf32>
    %181 = arith.mulf %178, %180 : vector<24x256xf32>
    %cst_52 = arith.constant 0.000000e+00 : f32
    %182 = vector.broadcast %cst_52 : f32 to vector<24x17xf32>
    %183 = vector.extract_strided_slice %134 {offsets = [0, 17], sizes = [24, 239], strides = [1, 1]} : vector<24x256xf32> to vector<24x239xf32>
    %184 = tpu.concatenate %183, %182 in 1 : vector<24x239xf32>, vector<24x17xf32> -> vector<24x256xf32>
    %185 = vector.extract_strided_slice %2 {offsets = [8, 0], sizes = [1, 256], strides = [1, 1]} : vector<9x256xf32> to vector<1x256xf32>
    %186 = vector.broadcast %185 : vector<1x256xf32> to vector<24x256xf32>
    %187 = arith.mulf %184, %186 : vector<24x256xf32>
    %188 = tpu.concatenate %142, %148, %154, %160, %163, %169, %175, %181, %187 in 0 : vector<24x256xf32>, vector<24x256xf32>, vector<24x256xf32>, vector<24x256xf32>, vector<24x256xf32>, vector<24x256xf32>, vector<24x256xf32>, vector<24x256xf32>, vector<24x256xf32> -> vector<216x256xf32>
    %cst_53 = arith.constant dense<0.000000e+00> : vector<8x256xf32>
    %189 = tpu.matmul %135, %188, %cst_53 {dimension_numbers = #tpu.dot_dimension_numbers<[1], [0], [0], [1], [0, 0, 1, 1], [], []>} : vector<8x216xf32>, vector<216x256xf32>, vector<8x256xf32> -> vector<8x256xf32>
    %190 = vector.broadcast %136 : vector<8x1xf32> to vector<8x256xf32>
    %191 = arith.addf %189, %190 : vector<8x256xf32>
    %cst_54 = arith.constant 0.000000e+00 : f32
    %192 = vector.broadcast %cst_54 : f32 to vector<8x256xf32>
    %193 = arith.maximumf %191, %192 : vector<8x256xf32>
    %c0_55 = arith.constant 0 : index
    %c0_56 = arith.constant 0 : index
    %194 = vector.load %arg12[%c0_55, %c0_56] : memref<2x8xf32, #tpu.memory_space<vmem>>, vector<2x8xf32>
    %cst_57 = arith.constant dense<0.000000e+00> : vector<2x256xf32>
    %195 = tpu.matmul %194, %193, %cst_57 {dimension_numbers = #tpu.dot_dimension_numbers<[1], [0], [0], [1], [0, 0, 1, 1], [], []>} : vector<2x8xf32>, vector<8x256xf32>, vector<2x256xf32> -> vector<2x256xf32>
    %c0_58 = arith.constant 0 : index
    %c0_59 = arith.constant 0 : index
    %196 = vector.load %arg13[%c0_58, %c0_59] : memref<2x1xf32, #tpu.memory_space<vmem>>, vector<2x1xf32>
    %197 = vector.broadcast %196 : vector<2x1xf32> to vector<2x256xf32>
    %198 = arith.addf %195, %197 : vector<2x256xf32>
    %c0_60 = arith.constant 0 : index
    %c0_61 = arith.constant 0 : index
    %c0_62 = arith.constant 0 : index
    %199 = vector.load %arg14[%c0_60, %c0_61, %c0_62] : memref<1x2x256xf32, #tpu.memory_space<vmem>>, vector<1x2x256xf32>
    %200 = vector.shape_cast %199 : vector<1x2x256xf32> to vector<2x256xf32>
    %201 = vector.shape_cast %198 : vector<2x256xf32> to vector<1x2x256xf32>
    tpu.vector_store %arg14[%c0_60, %c0_61, %c0_62], %201 {strides = array<i32>} : memref<1x2x256xf32, #tpu.memory_space<vmem>>, vector<1x2x256xf32>,
    %202 = arith.negf %198 : vector<2x256xf32>
    %203 = math.exp %202 : vector<2x256xf32>
    %cst_63 = arith.constant 1.000000e+00 : f32
    %204 = vector.broadcast %cst_63 : f32 to vector<2x256xf32>
    %205 = arith.addf %204, %203 : vector<2x256xf32>
    %206 = arith.divf %204, %205 : vector<2x256xf32>
    %c0_64 = arith.constant 0 : index
    %c0_65 = arith.constant 0 : index
    %c0_66 = arith.constant 0 : index
    %207 = vector.load %arg15[%c0_64, %c0_65, %c0_66] : memref<1x2x256xf32, #tpu.memory_space<vmem>>, vector<1x2x256xf32>
    %208 = vector.shape_cast %207 : vector<1x2x256xf32> to vector<2x256xf32>
    %209 = vector.shape_cast %206 : vector<2x256xf32> to vector<1x2x256xf32>
    tpu.vector_store %arg15[%c0_64, %c0_65, %c0_66], %209 {strides = array<i32>} : memref<1x2x256xf32, #tpu.memory_space<vmem>>, vector<1x2x256xf32>,
    return
  }
  func.func @transform_0(%arg0: i32) -> (i32, i32, i32) {
    %c0_i32 = arith.constant 0 : i32
    %c0_i32_0 = arith.constant 0 : i32
    %c0_i32_1 = arith.constant 0 : i32
    return %arg0, %c0_i32, %c0_i32_0 : i32, i32, i32
  }
  func.func @transform_1(%arg0: i32) -> (i32, i32) {
    %c0_i32 = arith.constant 0 : i32
    %c0_i32_0 = arith.constant 0 : i32
    %c0_i32_1 = arith.constant 0 : i32
    return %c0_i32, %c0_i32_0 : i32, i32
  }
  func.func @transform_2(%arg0: i32) -> (i32, i32) {
    %c0_i32 = arith.constant 0 : i32
    %c0_i32_0 = arith.constant 0 : i32
    %c0_i32_1 = arith.constant 0 : i32
    return %c0_i32, %c0_i32_0 : i32, i32
  }
  func.func @transform_3(%arg0: i32) -> (i32, i32) {
    %c0_i32 = arith.constant 0 : i32
    %c0_i32_0 = arith.constant 0 : i32
    %c0_i32_1 = arith.constant 0 : i32
    return %c0_i32, %c0_i32_0 : i32, i32
  }
  func.func @transform_4(%arg0: i32) -> (i32, i32) {
    %c0_i32 = arith.constant 0 : i32
    %c0_i32_0 = arith.constant 0 : i32
    %c0_i32_1 = arith.constant 0 : i32
    return %c0_i32, %c0_i32_0 : i32, i32
  }
  func.func @transform_5(%arg0: i32) -> (i32, i32) {
    %c0_i32 = arith.constant 0 : i32
    %c0_i32_0 = arith.constant 0 : i32
    %c0_i32_1 = arith.constant 0 : i32
    return %c0_i32, %c0_i32_0 : i32, i32
  }
  func.func @transform_6(%arg0: i32) -> (i32, i32) {
    %c0_i32 = arith.constant 0 : i32
    %c0_i32_0 = arith.constant 0 : i32
    %c0_i32_1 = arith.constant 0 : i32
    return %c0_i32, %c0_i32_0 : i32, i32
  }
  func.func @transform_7(%arg0: i32) -> (i32, i32) {
    %c0_i32 = arith.constant 0 : i32
    %c0_i32_0 = arith.constant 0 : i32
    %c0_i32_1 = arith.constant 0 : i32
    return %c0_i32, %c0_i32_0 : i32, i32
  }
  func.func @transform_8(%arg0: i32) -> (i32, i32) {
    %c0_i32 = arith.constant 0 : i32
    %c0_i32_0 = arith.constant 0 : i32
    %c0_i32_1 = arith.constant 0 : i32
    return %c0_i32, %c0_i32_0 : i32, i32
  }
  func.func @transform_9(%arg0: i32) -> (i32, i32) {
    %c0_i32 = arith.constant 0 : i32
    %c0_i32_0 = arith.constant 0 : i32
    %c0_i32_1 = arith.constant 0 : i32
    return %c0_i32, %c0_i32_0 : i32, i32
  }
  func.func @transform_10(%arg0: i32) -> (i32, i32) {
    %c0_i32 = arith.constant 0 : i32
    %c0_i32_0 = arith.constant 0 : i32
    %c0_i32_1 = arith.constant 0 : i32
    return %c0_i32, %c0_i32_0 : i32, i32
  }
  func.func @transform_11(%arg0: i32) -> (i32, i32) {
    %c0_i32 = arith.constant 0 : i32
    %c0_i32_0 = arith.constant 0 : i32
    %c0_i32_1 = arith.constant 0 : i32
    return %c0_i32, %c0_i32_0 : i32, i32
  }
  func.func @transform_12(%arg0: i32) -> (i32, i32) {
    %c0_i32 = arith.constant 0 : i32
    %c0_i32_0 = arith.constant 0 : i32
    %c0_i32_1 = arith.constant 0 : i32
    return %c0_i32, %c0_i32_0 : i32, i32
  }
  func.func @transform_13(%arg0: i32) -> (i32, i32, i32) {
    %c0_i32 = arith.constant 0 : i32
    %c0_i32_0 = arith.constant 0 : i32
    %c0_i32_1 = arith.constant 0 : i32
    return %arg0, %c0_i32, %c0_i32_0 : i32, i32, i32
  }
  func.func @transform_14(%arg0: i32) -> (i32, i32, i32) {
    %c0_i32 = arith.constant 0 : i32
    %c0_i32_0 = arith.constant 0 : i32
    %c0_i32_1 = arith.constant 0 : i32
    return %arg0, %c0_i32, %c0_i32_0 : i32, i32, i32
  }
}

</mosaic_0001>

<llo_original>
// kernel: tpu_custom_call.1
$region0: #{tpu_custom_call.1}
  #allocation0 [shape = 'u32[]', space=smem, size = 0x4, offset = 0x4, fixed_abs, tag = 'smem constant byte address 0x4 - core index']
  #allocation1 [shape = 'u32[72,128]{1,0:T(1,128)}', space=vmem, size = 0x9000, scoped, tag = 'internal scratch']
  %s0 = inlined_call_operand.vmem [shape: f32[2,3,256], index: 0, kind: input, shape index: {}]
  %s1 = inlined_call_operand.vmem [shape: f32[9,256], index: 1, kind: input, shape index: {}]
  %s2 = inlined_call_operand.vmem [shape: f32[9,64], index: 2, kind: input, shape index: {}]
  %s3 = inlined_call_operand.vmem [shape: f32[256,64], index: 3, kind: input, shape index: {}]
  %s4 = inlined_call_operand.vmem [shape: f32[64,256], index: 4, kind: input, shape index: {}]
  %s5 = inlined_call_operand.vmem [shape: f32[8,27], index: 5, kind: input, shape index: {}]
  %s6 = inlined_call_operand.vmem [shape: f32[8,1], index: 6, kind: input, shape index: {}]
  %s7 = inlined_call_operand.vmem [shape: f32[16,72], index: 7, kind: input, shape index: {}]
  %s8 = inlined_call_operand.vmem [shape: f32[16,1], index: 8, kind: input, shape index: {}]
  %s9 = inlined_call_operand.vmem [shape: f32[8,216], index: 9, kind: input, shape index: {}]
  %s10 = inlined_call_operand.vmem [shape: f32[8,1], index: 10, kind: input, shape index: {}]
  %s11 = inlined_call_operand.vmem [shape: f32[2,8], index: 11, kind: input, shape index: {}]
  %s12 = inlined_call_operand.vmem [shape: f32[2,1], index: 12, kind: input, shape index: {}]
  %s13 = inlined_call_operand.hbm [shape: f32[2,2,256], index: 13, kind: output, shape index: {0}]
  %s14 = inlined_call_operand.hbm [shape: f32[2,2,256], index: 14, kind: output, shape index: {1}]
  %15 = xla_tuple %s13, %s14
  %s16 = sld [smem:[#allocation0]]
  $region93: #{tpu_custom_call.1} parent=0
    _
  %s18 = ssub.s32 1, %s16
  %s19 = scalar_select 0, %s18, %s16
  $region1: #{tpu_custom_call.1} parent=0
    #allocation2 [shape = 'u8[4096]{0}', space=vmem, size = 0x1000, scoped, tag = 'output window, operand 0']
    #allocation3 [shape = 's32[2]{0}', space=sflag, size = 0x8, scoped, tag = 'scoped memory for tpu_custom_call.1']
    #allocation4 [shape = 'u8[4096]{0}', space=vmem, size = 0x1000, scoped, tag = 'output window, operand 1']
    #allocation5 [shape = 's32[2]{0}', space=sflag, size = 0x8, scoped, tag = 'scoped memory for tpu_custom_call.1']
    %20 = vsyncpa [#allocation3], 0
    %s21 = scalar_lea.sflag [#allocation3], 1
    %22 = vsyncpa %s21, 0
    %23 = vsyncpa [#allocation5], 0
    %s24 = scalar_lea.sflag [#allocation5], 1
    %25 = vsyncpa %s24, 0
    loop: start=0, step=1, limit=4
    $region2: #{tpu_custom_call.1} parent=1 // loop_pre_header
      _
    $region3: #{tpu_custom_call.1} parent=1 // loop_header
      %s27 = sphi 0, %s31
      %p28 = scmp.ge.s32.totalorder %s27, 4
      %s37 = sphi 0, %s39
      %s40 = sphi 0, %s37
      %s41 = sphi 0, %s40
      %s57 = sphi 0, %s41
      %s61 = sphi 0, %s61
      %s63 = sphi 0, %s61
      %s64 = sphi 0, %s63
      %s78 = sphi 0, %s64
      %s82 = sphi 0, %s82
      %s84 = sphi 0, %s82
      %s85 = sphi 0, %s84
      %s99 = sphi 0, %s85
      %s103 = sphi 0, %s103
      %s105 = sphi 0, %s103
      %s106 = sphi 0, %s105
      %s120 = sphi 0, %s106
      %s124 = sphi 0, %s124
      %s126 = sphi 0, %s124
      %s127 = sphi 0, %s126
      %s141 = sphi 0, %s127
      %s145 = sphi 0, %s145
      %s147 = sphi 0, %s145
      %s148 = sphi 0, %s147
      %s162 = sphi 0, %s148
      %s166 = sphi 0, %s166
      %s168 = sphi 0, %s166
      %s169 = sphi 0, %s168
      %s183 = sphi 0, %s169
      %s187 = sphi 0, %s187
      %s189 = sphi 0, %s187
      %s190 = sphi 0, %s189
      %s204 = sphi 0, %s190
      %s208 = sphi 0, %s208
      %s210 = sphi 0, %s208
      %s211 = sphi 0, %s210
      %s225 = sphi 0, %s211
      %s229 = sphi 0, %s229
      %s231 = sphi 0, %s229
      %s232 = sphi 0, %s231
      %s246 = sphi 0, %s232
      %s250 = sphi 0, %s250
      %s252 = sphi 0, %s250
      %s253 = sphi 0, %s252
      %s267 = sphi 0, %s253
      %s271 = sphi 0, %s271
      %s273 = sphi 0, %s271
      %s274 = sphi 0, %s273
      %s288 = sphi 0, %s274
      %s292 = sphi 0, %s292
      %s294 = sphi 0, %s292
      %s295 = sphi 0, %s294
      %s309 = sphi 0, %s295
      %s315 = sphi 0, %s317
      %s318 = sphi 0, %s315
      %s319 = sphi 0, %s318
      %s335 = sphi 0, %s319
      %s341 = sphi 0, %s343
      %s344 = sphi 0, %s341
      %s345 = sphi 0, %s344
      %s361 = sphi 0, %s345
    $region4: #{tpu_custom_call.1} parent=1 // loop_header_branch
      %30 = sbr.rel (%p28) target = $region8
    $region5: #{tpu_custom_call.1} parent=1 // loop_body
      %s32 = ssub.s32 %s27, 1
      %s33 = ssub.s32 %s27, 2
      %s34 = sadd.s32 %s27, 1
      %s35 = ssub.s32 %s27, %s34
      %p36 = scmp.eq.s32.totalorder %s35, 0
      %s38 = sadd.s32 %s37, 1
      %s39 = scalar_select %p36, %s37, %s38
      %p42 = pneg %p36
      %p43 = scmp.eq.s32.totalorder %s27, 1
      %p44 = por %p42, %p43
      %p45 = scmp.ne.s32.totalorder %s37, %s40
      %p46 = scmp.eq.s32.totalorder %s27, 0
      %p47 = por %p45, %p46
      %p48 = scmp.ne.s32.totalorder %s37, %s40
      %p49 = scmp.eq.s32.totalorder %s32, 1
      %p50 = por %p48, %p49
      %p51 = scmp.ne.s32.totalorder %s40, %s41
      %p52 = scmp.eq.s32.totalorder %s32, 0
      %p53 = por %p51, %p52
      %p54 = scmp.ne.s32.totalorder %s40, %s41
      %p55 = scmp.eq.s32.totalorder %s33, 1
      %p56 = por %p54, %p55
      %p58 = scmp.ne.s32.totalorder %s41, %s57
      %p59 = scmp.eq.s32.totalorder %s33, 0
      %p60 = por %p58, %p59
      %s62 = sadd.s32 %s61, 1
      %p65 = scmp.eq.s32.totalorder %s27, 1
      %p66 = scmp.ne.s32.totalorder %s61, %s63
      %p67 = scmp.eq.s32.totalorder %s27, 0
      %p68 = por %p66, %p67
      %p69 = scmp.ne.s32.totalorder %s61, %s63
      %p70 = scmp.eq.s32.totalorder %s32, 1
      %p71 = por %p69, %p70
      %p72 = scmp.ne.s32.totalorder %s63, %s64
      %p73 = scmp.eq.s32.totalorder %s32, 0
      %p74 = por %p72, %p73
      %p75 = scmp.ne.s32.totalorder %s63, %s64
      %p76 = scmp.eq.s32.totalorder %s33, 1
      %p77 = por %p75, %p76
      %p79 = scmp.ne.s32.totalorder %s64, %s78
      %p80 = scmp.eq.s32.totalorder %s33, 0
      %p81 = por %p79, %p80
      %s83 = sadd.s32 %s82, 1
      %p86 = scmp.eq.s32.totalorder %s27, 1
      %p87 = scmp.ne.s32.totalorder %s82, %s84
      %p88 = scmp.eq.s32.totalorder %s27, 0
      %p89 = por %p87, %p88
      %p90 = scmp.ne.s32.totalorder %s82, %s84
      %p91 = scmp.eq.s32.totalorder %s32, 1
      %p92 = por %p90, %p91
      %p93 = scmp.ne.s32.totalorder %s84, %s85
      %p94 = scmp.eq.s32.totalorder %s32, 0
      %p95 = por %p93, %p94
      %p96 = scmp.ne.s32.totalorder %s84, %s85
      %p97 = scmp.eq.s32.totalorder %s33, 1
      %p98 = por %p96, %p97
      %p100 = scmp.ne.s32.totalorder %s85, %s99
      %p101 = scmp.eq.s32.totalorder %s33, 0
      %p102 = por %p100, %p101
      %s104 = sadd.s32 %s103, 1
      %p107 = scmp.eq.s32.totalorder %s27, 1
      %p108 = scmp.ne.s32.totalorder %s103, %s105
      %p109 = scmp.eq.s32.totalorder %s27, 0
      %p110 = por %p108, %p109
      %p111 = scmp.ne.s32.totalorder %s103, %s105
      %p112 = scmp.eq.s32.totalorder %s32, 1
      %p113 = por %p111, %p112
      %p114 = scmp.ne.s32.totalorder %s105, %s106
      %p115 = scmp.eq.s32.totalorder %s32, 0
      %p116 = por %p114, %p115
      %p117 = scmp.ne.s32.totalorder %s105, %s106
      %p118 = scmp.eq.s32.totalorder %s33, 1
      %p119 = por %p117, %p118
      %p121 = scmp.ne.s32.totalorder %s106, %s120
      %p122 = scmp.eq.s32.totalorder %s33, 0
      %p123 = por %p121, %p122
      %s125 = sadd.s32 %s124, 1
      %p128 = scmp.eq.s32.totalorder %s27, 1
      %p129 = scmp.ne.s32.totalorder %s124, %s126
      %p130 = scmp.eq.s32.totalorder %s27, 0
      %p131 = por %p129, %p130
      %p132 = scmp.ne.s32.totalorder %s124, %s126
      %p133 = scmp.eq.s32.totalorder %s32, 1
      %p134 = por %p132, %p133
      %p135 = scmp.ne.s32.totalorder %s126, %s127
      %p136 = scmp.eq.s32.totalorder %s32, 0
      %p137 = por %p135, %p136
      %p138 = scmp.ne.s32.totalorder %s126, %s127
      %p139 = scmp.eq.s32.totalorder %s33, 1
      %p140 = por %p138, %p139
      %p142 = scmp.ne.s32.totalorder %s127, %s141
      %p143 = scmp.eq.s32.totalorder %s33, 0
      %p144 = por %p142, %p143
      %s146 = sadd.s32 %s145, 1
      %p149 = scmp.eq.s32.totalorder %s27, 1
      %p150 = scmp.ne.s32.totalorder %s145, %s147
      %p151 = scmp.eq.s32.totalorder %s27, 0
      %p152 = por %p150, %p151
      %p153 = scmp.ne.s32.totalorder %s145, %s147
      %p154 = scmp.eq.s32.totalorder %s32, 1
      %p155 = por %p153, %p154
      %p156 = scmp.ne.s32.totalorder %s147, %s148
      %p157 = scmp.eq.s32.totalorder %s32, 0
      %p158 = por %p156, %p157
      %p159 = scmp.ne.s32.totalorder %s147, %s148
      %p160 = scmp.eq.s32.totalorder %s33, 1
      %p161 = por %p159, %p160
      %p163 = scmp.ne.s32.totalorder %s148, %s162
      %p164 = scmp.eq.s32.totalorder %s33, 0
      %p165 = por %p163, %p164
      %s167 = sadd.s32 %s166, 1
      %p170 = scmp.eq.s32.totalorder %s27, 1
      %p171 = scmp.ne.s32.totalorder %s166, %s168
      %p172 = scmp.eq.s32.totalorder %s27, 0
      %p173 = por %p171, %p172
      %p174 = scmp.ne.s32.totalorder %s166, %s168
      %p175 = scmp.eq.s32.totalorder %s32, 1
      %p176 = por %p174, %p175
      %p177 = scmp.ne.s32.totalorder %s168, %s169
      %p178 = scmp.eq.s32.totalorder %s32, 0
      %p179 = por %p177, %p178
      %p180 = scmp.ne.s32.totalorder %s168, %s169
      %p181 = scmp.eq.s32.totalorder %s33, 1
      %p182 = por %p180, %p181
      %p184 = scmp.ne.s32.totalorder %s169, %s183
      %p185 = scmp.eq.s32.totalorder %s33, 0
      %p186 = por %p184, %p185
      %s188 = sadd.s32 %s187, 1
      %p191 = scmp.eq.s32.totalorder %s27, 1
      %p192 = scmp.ne.s32.totalorder %s187, %s189
      %p193 = scmp.eq.s32.totalorder %s27, 0
      %p194 = por %p192, %p193
      %p195 = scmp.ne.s32.totalorder %s187, %s189
      %p196 = scmp.eq.s32.totalorder %s32, 1
      %p197 = por %p195, %p196
      %p198 = scmp.ne.s32.totalorder %s189, %s190
      %p199 = scmp.eq.s32.totalorder %s32, 0
      %p200 = por %p198, %p199
      %p201 = scmp.ne.s32.totalorder %s189, %s190
      %p202 = scmp.eq.s32.totalorder %s33, 1
      %p203 = por %p201, %p202
      %p205 = scmp.ne.s32.totalorder %s190, %s204
      %p206 = scmp.eq.s32.totalorder %s33, 0
      %p207 = por %p205, %p206
      %s209 = sadd.s32 %s208, 1
      %p212 = scmp.eq.s32.totalorder %s27, 1
      %p213 = scmp.ne.s32.totalorder %s208, %s210
      %p214 = scmp.eq.s32.totalorder %s27, 0
      %p215 = por %p213, %p214
      %p216 = scmp.ne.s32.totalorder %s208, %s210
      %p217 = scmp.eq.s32.totalorder %s32, 1
      %p218 = por %p216, %p217
      %p219 = scmp.ne.s32.totalorder %s210, %s211
      %p220 = scmp.eq.s32.totalorder %s32, 0
      %p221 = por %p219, %p220
      %p222 = scmp.ne.s32.totalorder %s210, %s211
      %p223 = scmp.eq.s32.totalorder %s33, 1
      %p224 = por %p222, %p223
      %p226 = scmp.ne.s32.totalorder %s211, %s225
      %p227 = scmp.eq.s32.totalorder %s33, 0
      %p228 = por %p226, %p227
      %s230 = sadd.s32 %s229, 1
      %p233 = scmp.eq.s32.totalorder %s27, 1
      %p234 = scmp.ne.s32.totalorder %s229, %s231
      %p235 = scmp.eq.s32.totalorder %s27, 0
      %p236 = por %p234, %p235
      %p237 = scmp.ne.s32.totalorder %s229, %s231
      %p238 = scmp.eq.s32.totalorder %s32, 1
      %p239 = por %p237, %p238
      %p240 = scmp.ne.s32.totalorder %s231, %s232
      %p241 = scmp.eq.s32.totalorder %s32, 0
      %p242 = por %p240, %p241
      %p243 = scmp.ne.s32.totalorder %s231, %s232
      %p244 = scmp.eq.s32.totalorder %s33, 1
      %p245 = por %p243, %p244
      %p247 = scmp.ne.s32.totalorder %s232, %s246
      %p248 = scmp.eq.s32.totalorder %s33, 0
      %p249 = por %p247, %p248
      %s251 = sadd.s32 %s250, 1
      %p254 = scmp.eq.s32.totalorder %s27, 1
      %p255 = scmp.ne.s32.totalorder %s250, %s252
      %p256 = scmp.eq.s32.totalorder %s27, 0
      %p257 = por %p255, %p256
      %p258 = scmp.ne.s32.totalorder %s250, %s252
      %p259 = scmp.eq.s32.totalorder %s32, 1
      %p260 = por %p258, %p259
      %p261 = scmp.ne.s32.totalorder %s252, %s253
      %p262 = scmp.eq.s32.totalorder %s32, 0
      %p263 = por %p261, %p262
      %p264 = scmp.ne.s32.totalorder %s252, %s253
      %p265 = scmp.eq.s32.totalorder %s33, 1
      %p266 = por %p264, %p265
      %p268 = scmp.ne.s32.totalorder %s253, %s267
      %p269 = scmp.eq.s32.totalorder %s33, 0
      %p270 = por %p268, %p269
      %s272 = sadd.s32 %s271, 1
      %p275 = scmp.eq.s32.totalorder %s27, 1
      %p276 = scmp.ne.s32.totalorder %s271, %s273
      %p277 = scmp.eq.s32.totalorder %s27, 0
      %p278 = por %p276, %p277
      %p279 = scmp.ne.s32.totalorder %s271, %s273
      %p280 = scmp.eq.s32.totalorder %s32, 1
      %p281 = por %p279, %p280
      %p282 = scmp.ne.s32.totalorder %s273, %s274
      %p283 = scmp.eq.s32.totalorder %s32, 0
      %p284 = por %p282, %p283
      %p285 = scmp.ne.s32.totalorder %s273, %s274
      %p286 = scmp.eq.s32.totalorder %s33, 1
      %p287 = por %p285, %p286
      %p289 = scmp.ne.s32.totalorder %s274, %s288
      %p290 = scmp.eq.s32.totalorder %s33, 0
      %p291 = por %p289, %p290
      %s293 = sadd.s32 %s292, 1
      %p296 = scmp.eq.s32.totalorder %s27, 1
      %p297 = scmp.ne.s32.totalorder %s292, %s294
      %p298 = scmp.eq.s32.totalorder %s27, 0
      %p299 = por %p297, %p298
      %p300 = scmp.ne.s32.totalorder %s292, %s294
      %p301 = scmp.eq.s32.totalorder %s32, 1
      %p302 = por %p300, %p301
      %p303 = scmp.ne.s32.totalorder %s294, %s295
      %p304 = scmp.eq.s32.totalorder %s32, 0
      %p305 = por %p303, %p304
      %p306 = scmp.ne.s32.totalorder %s294, %s295
      %p307 = scmp.eq.s32.totalorder %s33, 1
      %p308 = por %p306, %p307
      %p310 = scmp.ne.s32.totalorder %s295, %s309
      %p311 = scmp.eq.s32.totalorder %s33, 0
      %p312 = por %p310, %p311
      %s313 = ssub.s32 %s27, %s34
      %p314 = scmp.eq.s32.totalorder %s313, 0
      %s316 = sadd.s32 %s315, 1
      %s317 = scalar_select %p314, %s315, %s316
      %p320 = pneg %p314
      %p321 = scmp.eq.s32.totalorder %s27, 1
      %p322 = por %p320, %p321
      %p323 = scmp.ne.s32.totalorder %s315, %s318
      %p324 = scmp.eq.s32.totalorder %s27, 0
      %p325 = por %p323, %p324
      %p326 = scmp.ne.s32.totalorder %s315, %s318
      %p327 = scmp.eq.s32.totalorder %s32, 1
      %p328 = por %p326, %p327
      %p329 = scmp.ne.s32.totalorder %s318, %s319
      %p330 = scmp.eq.s32.totalorder %s32, 0
      %p331 = por %p329, %p330
      %p332 = scmp.ne.s32.totalorder %s318, %s319
      %p333 = scmp.eq.s32.totalorder %s33, 1
      %p334 = por %p332, %p333
      %p336 = scmp.ne.s32.totalorder %s319, %s335
      %p337 = scmp.eq.s32.totalorder %s33, 0
      %p338 = por %p336, %p337
      %s339 = ssub.s32 %s27, %s34
      %p340 = scmp.eq.s32.totalorder %s339, 0
      %s342 = sadd.s32 %s341, 1
      %s343 = scalar_select %p340, %s341, %s342
      %p346 = pneg %p340
      %p347 = scmp.eq.s32.totalorder %s27, 1
      %p348 = por %p346, %p347
      %p349 = scmp.ne.s32.totalorder %s341, %s344
      %p350 = scmp.eq.s32.totalorder %s27, 0
      %p351 = por %p349, %p350
      %p352 = scmp.ne.s32.totalorder %s341, %s344
      %p353 = scmp.eq.s32.totalorder %s32, 1
      %p354 = por %p352, %p353
      %p355 = scmp.ne.s32.totalorder %s344, %s345
      %p356 = scmp.eq.s32.totalorder %s32, 0
      %p357 = por %p355, %p356
      %p358 = scmp.ne.s32.totalorder %s344, %s345
      %p359 = scmp.eq.s32.totalorder %s33, 1
      %p360 = por %p358, %p359
      %p362 = scmp.ne.s32.totalorder %s345, %s361
      %p363 = scmp.eq.s32.totalorder %s33, 0
      %p364 = por %p362, %p363
      %p365 = scmp.le.s32.totalorder 1, %s27
      %p366 = scmp.lt.s32.totalorder %s27, 3
      %p367 = pnand %p365, %p366
      %p368 = pneg %p367
      // Predicated region
      $region9: #{tpu_custom_call.1} parent=5 // pred_check
        _
      $region10: #{tpu_custom_call.1} parent=5 // pred_check_branch
        %370 = sbr.rel (%p367) target = $region12
      $region11: #{tpu_custom_call.1} parent=5 // pred_region
        %s371 = ssub.s32 %s27, 1
        // Predicated region
        $region13: #{tpu_custom_call.1} parent=11 // pred_check
          %p372 = pneg %p74
        $region14: #{tpu_custom_call.1} parent=11 // pred_check_branch
          %374 = sbr.rel (%p372) target = $region16
        $region15: #{tpu_custom_call.1} parent=11 // pred_region
          _
        $region16: #{tpu_custom_call.1} parent=11 // pred_fallthru
          _
        // Predicated region
        $region17: #{tpu_custom_call.1} parent=11 // pred_check
          %p375 = pneg %p95
        $region18: #{tpu_custom_call.1} parent=11 // pred_check_branch
          %377 = sbr.rel (%p375) target = $region20
        $region19: #{tpu_custom_call.1} parent=11 // pred_region
          _
        $region20: #{tpu_custom_call.1} parent=11 // pred_fallthru
          _
        // Predicated region
        $region21: #{tpu_custom_call.1} parent=11 // pred_check
          %p378 = pneg %p116
        $region22: #{tpu_custom_call.1} parent=11 // pred_check_branch
          %380 = sbr.rel (%p378) target = $region24
        $region23: #{tpu_custom_call.1} parent=11 // pred_region
          _
        $region24: #{tpu_custom_call.1} parent=11 // pred_fallthru
          _
        // Predicated region
        $region25: #{tpu_custom_call.1} parent=11 // pred_check
          %p381 = pneg %p137
        $region26: #{tpu_custom_call.1} parent=11 // pred_check_branch
          %383 = sbr.rel (%p381) target = $region28
        $region27: #{tpu_custom_call.1} parent=11 // pred_region
          _
        $region28: #{tpu_custom_call.1} parent=11 // pred_fallthru
          _
        // Predicated region
        $region29: #{tpu_custom_call.1} parent=11 // pred_check
          %p384 = pneg %p158
        $region30: #{tpu_custom_call.1} parent=11 // pred_check_branch
          %386 = sbr.rel (%p384) target = $region32
        $region31: #{tpu_custom_call.1} parent=11 // pred_region
          _
        $region32: #{tpu_custom_call.1} parent=11 // pred_fallthru
          _
        // Predicated region
        $region33: #{tpu_custom_call.1} parent=11 // pred_check
          %p387 = pneg %p179
        $region34: #{tpu_custom_call.1} parent=11 // pred_check_branch
          %389 = sbr.rel (%p387) target = $region36
        $region35: #{tpu_custom_call.1} parent=11 // pred_region
          _
        $region36: #{tpu_custom_call.1} parent=11 // pred_fallthru
          _
        // Predicated region
        $region37: #{tpu_custom_call.1} parent=11 // pred_check
          %p390 = pneg %p200
        $region38: #{tpu_custom_call.1} parent=11 // pred_check_branch
          %392 = sbr.rel (%p390) target = $region40
        $region39: #{tpu_custom_call.1} parent=11 // pred_region
          _
        $region40: #{tpu_custom_call.1} parent=11 // pred_fallthru
          _
        // Predicated region
        $region41: #{tpu_custom_call.1} parent=11 // pred_check
          %p393 = pneg %p221
        $region42: #{tpu_custom_call.1} parent=11 // pred_check_branch
          %395 = sbr.rel (%p393) target = $region44
        $region43: #{tpu_custom_call.1} parent=11 // pred_region
          _
        $region44: #{tpu_custom_call.1} parent=11 // pred_fallthru
          _
        // Predicated region
        $region45: #{tpu_custom_call.1} parent=11 // pred_check
          %p396 = pneg %p242
        $region46: #{tpu_custom_call.1} parent=11 // pred_check_branch
          %398 = sbr.rel (%p396) target = $region48
        $region47: #{tpu_custom_call.1} parent=11 // pred_region
          _
        $region48: #{tpu_custom_call.1} parent=11 // pred_fallthru
          _
        // Predicated region
        $region49: #{tpu_custom_call.1} parent=11 // pred_check
          %p399 = pneg %p263
        $region50: #{tpu_custom_call.1} parent=11 // pred_check_branch
          %401 = sbr.rel (%p399) target = $region52
        $region51: #{tpu_custom_call.1} parent=11 // pred_region
          _
        $region52: #{tpu_custom_call.1} parent=11 // pred_fallthru
          _
        // Predicated region
        $region53: #{tpu_custom_call.1} parent=11 // pred_check
          %p402 = pneg %p284
        $region54: #{tpu_custom_call.1} parent=11 // pred_check_branch
          %404 = sbr.rel (%p402) target = $region56
        $region55: #{tpu_custom_call.1} parent=11 // pred_region
          _
        $region56: #{tpu_custom_call.1} parent=11 // pred_fallthru
          _
        // Predicated region
        $region57: #{tpu_custom_call.1} parent=11 // pred_check
          %p405 = pneg %p305
        $region58: #{tpu_custom_call.1} parent=11 // pred_check_branch
          %407 = sbr.rel (%p405) target = $region60
        $region59: #{tpu_custom_call.1} parent=11 // pred_region
          _
        $region60: #{tpu_custom_call.1} parent=11 // pred_fallthru
          _
      $region12: #{tpu_custom_call.1} parent=5 // pred_fallthru
        _
      %p408 = scmp.lt.s32.totalorder %s27, 2
      // Predicated region
      $region61: #{tpu_custom_call.1} parent=5 // pred_check
        %p409 = pneg %p408
      $region62: #{tpu_custom_call.1} parent=5 // pred_check_branch
        %411 = sbr.rel (%p409) target = $region64
      $region63: #{tpu_custom_call.1} parent=5 // pred_region
        // Predicated region
        $region65: #{tpu_custom_call.1} parent=63 // pred_check
          %p412 = pneg %p47
        $region66: #{tpu_custom_call.1} parent=63 // pred_check_branch
          %414 = sbr.rel (%p412) target = $region68
        $region67: #{tpu_custom_call.1} parent=63 // pred_region
          %p415 = scmp.lt.s32.totalorder %s27, 1
          %s416 = scalar_select %p415, %s27, 1
          %s417 = smul.addr %s416, 2
          %s418 = smul.addr %s417, 4
          %s419 = scalar_lea.vmem %s0, %s418
        $region68: #{tpu_custom_call.1} parent=63 // pred_fallthru
          _
      $region64: #{tpu_custom_call.1} parent=5 // pred_fallthru
        _
      %p420 = scmp.le.s32.totalorder 1, %s27
      %p421 = scmp.lt.s32.totalorder %s27, 3
      %p422 = pnand %p420, %p421
      %p423 = pneg %p422
      // Predicated region
      $region69: #{tpu_custom_call.1} parent=5 // pred_check
        _
      $region70: #{tpu_custom_call.1} parent=5 // pred_check_branch
        %425 = sbr.rel (%p422) target = $region72
      $region71: #{tpu_custom_call.1} parent=5 // pred_region
        %s426 = ssub.s32 %s27, 1
        %p427 = scmp.lt.s32.totalorder %s32, 1
        %s428 = scalar_select %p427, %s32, 1
        %s429 = smul.addr %s428, 2
        %s430 = smul.addr %s429, 4
        %s431 = scalar_lea.vmem %s0, %s430
        %p432 = pneg %p53
        %p433 = pneg %p50
        %p434 = pneg %p74
        %p435 = pneg %p71
        %p436 = pneg %p95
        %p437 = pneg %p92
        %p438 = pneg %p116
        %p439 = pneg %p113
        %p440 = pneg %p137
        %p441 = pneg %p134
        %p442 = pneg %p158
        %p443 = pneg %p155
        %p444 = pneg %p179
        %p445 = pneg %p176
        %p446 = pneg %p200
        %p447 = pneg %p197
        %p448 = pneg %p221
        %p449 = pneg %p218
        %p450 = pneg %p242
        %p451 = pneg %p239
        %p452 = pneg %p263
        %p453 = pneg %p260
        %p454 = pneg %p284
        %p455 = pneg %p281
        %p456 = pneg %p305
        %p457 = pneg %p302
        %p458 = pneg %p331
        %p459 = pneg %p328
        %s460 = sand.u32 %s318, 1
        %s461 = scalar_lea.sflag [#allocation3], %s460
        %s462 = sand.u32 %s318, 1
        %s463 = smul.addr %s462, 4
        %s464 = scalar_lea.vmem [#allocation2], %s463
        %p465 = pneg %p357
        %p466 = pneg %p354
        %s467 = sand.u32 %s344, 1
        %s468 = scalar_lea.sflag [#allocation5], %s467
        %s469 = sand.u32 %s344, 1
        %s470 = smul.addr %s469, 4
        %s471 = scalar_lea.vmem [#allocation4], %s470
        %p472 = scmp.lt.s32.totalorder %s32, 1
        %s473 = scalar_select %p472, %s32, 1
        %s474 = smul.addr %s473, 2
        %s475 = smul.addr %s474, 4
        %s476 = scalar_lea.vmem %s0, %s475
        %v477 = vld [vmem:[%s476] sm:$0x77]
        %v478 = vld [vmem:[%s1] sm:$0xff]
        %v479 = vld [vmem:[%s1 + $0x8] sm:$0xff]
        %v480 = vld [vmem:[%s1 + $0x10] sm:$0x1]
        %v481 = vld [vmem:[%s1 + $0x18] sm:$0x1]
        %v482 = vld [vmem:[%s2] sm:$0xff]
        %v483 = vld [vmem:[%s2 + $0x8] sm:$0x1]
        %v484 = vld [vmem:[%s5] sm:$0xff]
        %v485 = vld [vmem:[%s6] sm:$0xff]
        %487 = vst [vmem:[#allocation1] ss:$2 sm:$0xff] %v477
        %v488 = vld.sshfl [vmem:[#allocation1] sm:$0xff pattern:$0x75316420]
        %v489 = vld.sshfl [vmem:[#allocation1 + $0x8] sm:$0xff pattern:$0x75316420]
        %490 = vrot.lane.b32.xlu0 %v488, 17
        %v491 = vpop.permute.xlu0 %490
        %492 = vrot.lane.b32.xlu0 %v489, 17
        %v493 = vpop.permute.xlu0 %492
        %vm494 = vcmask 138240
        %v495 = vsel %vm494, %v491, %v493
        %v498 = vsel %vm494, 0.0, %v491
        %v499 = vperm.slane %v478, 0
        %v500 = vperm.slane %v479, 0
        %v501 = vmul.f32 %v498, %v499
        %v502 = vmul.f32 %v495, %v500
        %503 = vst [vmem:[#allocation1] ss:$2 sm:$0xff] %v477
        %v504 = vld.sshfl [vmem:[#allocation1] sm:$0xff pattern:$0x75316420]
        %v505 = vld.sshfl [vmem:[#allocation1 + $0x8] sm:$0xff pattern:$0x75316420]
        %506 = vrot.lane.b32.xlu0 %v504, 16
        %v507 = vpop.permute.xlu0 %506
        %508 = vrot.lane.b32.xlu0 %v505, 16
        %v509 = vpop.permute.xlu0 %508
        %vm510 = vcmask 130048
        %v511 = vsel %vm510, %v507, %v509
        %v514 = vsel %vm510, 0.0, %v507
        %v515 = vperm.slane %v478, 1
        %v516 = vperm.slane %v479, 1
        %v517 = vmul.f32 %v514, %v515
        %v518 = vmul.f32 %v511, %v516
        %519 = vst [vmem:[#allocation1] ss:$2 sm:$0xff] %v477
        %v520 = vld.sshfl [vmem:[#allocation1] sm:$0xff pattern:$0x75316420]
        %v521 = vld.sshfl [vmem:[#allocation1 + $0x8] sm:$0xff pattern:$0x75316420]
        %522 = vrot.lane.b32.xlu0 %v520, 15
        %v523 = vpop.permute.xlu0 %522
        %524 = vrot.lane.b32.xlu0 %v521, 15
        %v525 = vpop.permute.xlu0 %524
        %vm526 = vcmask 121856
        %v527 = vsel %vm526, %v523, %v525
        %v530 = vsel %vm526, 0.0, %v523
        %v531 = vperm.slane %v478, 2
        %v532 = vperm.slane %v479, 2
        %v533 = vmul.f32 %v530, %v531
        %v534 = vmul.f32 %v527, %v532
        %535 = vst [vmem:[#allocation1] ss:$2 sm:$0xff] %v477
        %v536 = vld.sshfl [vmem:[#allocation1] sm:$0xff pattern:$0x75316420]
        %v537 = vld.sshfl [vmem:[#allocation1 + $0x8] sm:$0xff pattern:$0x75316420]
        %538 = vrot.lane.b32.xlu0 %v536, 1
        %v539 = vpop.permute.xlu0 %538
        %540 = vrot.lane.b32.xlu0 %v537, 1
        %v541 = vpop.permute.xlu0 %540
        %vm542 = vcmask 7168
        %v543 = vsel %vm542, %v539, %v541
        %v546 = vsel %vm542, 0.0, %v539
        %v547 = vperm.slane %v478, 3
        %v548 = vperm.slane %v479, 3
        %v549 = vmul.f32 %v546, %v547
        %v550 = vmul.f32 %v543, %v548
        %v551 = vperm.slane %v478, 4
        %v552 = vperm.slane %v479, 4
        %v555 = vrot.slane %v552, 4
        %vm556 = vcmask 1043456
        %v557 = vsel %vm556, %v551, %v555
        %v559 = vmul.f32 %v477, %v557
        %560 = vst [vmem:[#allocation1] ss:$2 sm:$0xff] %v477
        %v561 = vld.sshfl [vmem:[#allocation1] sm:$0xff pattern:$0x75316420]
        %v562 = vld.sshfl [vmem:[#allocation1 + $0x8] sm:$0xff pattern:$0x75316420]
        %563 = vrot.lane.b32.xlu0 %v561, 127
        %v564 = vpop.permute.xlu0 %563
        %565 = vrot.lane.b32.xlu0 %v562, 127
        %v566 = vpop.permute.xlu0 %565
        %vm567 = vcmask 1039360
        %v568 = vsel %vm567, %v564, %v566
        %v571 = vsel %vm567, %v566, 0.0
        %v572 = vperm.slane %v478, 5
        %v573 = vperm.slane %v479, 5
        %v574 = vmul.f32 %v568, %v572
        %v575 = vmul.f32 %v571, %v573
        %576 = vst [vmem:[#allocation1] ss:$2 sm:$0xff] %v477
        %v577 = vld.sshfl [vmem:[#allocation1] sm:$0xff pattern:$0x75316420]
        %v578 = vld.sshfl [vmem:[#allocation1 + $0x8] sm:$0xff pattern:$0x75316420]
        %579 = vrot.lane.b32.xlu0 %v577, 113
        %v580 = vpop.permute.xlu0 %579
        %581 = vrot.lane.b32.xlu0 %v578, 113
        %v582 = vpop.permute.xlu0 %581
        %vm583 = vcmask 924672
        %v584 = vsel %vm583, %v580, %v582
        %v587 = vsel %vm583, %v582, 0.0
        %v588 = vperm.slane %v478, 6
        %v589 = vperm.slane %v479, 6
        %v590 = vmul.f32 %v584, %v588
        %v591 = vmul.f32 %v587, %v589
        %592 = vst [vmem:[#allocation1] ss:$2 sm:$0xff] %v477
        %v593 = vld.sshfl [vmem:[#allocation1] sm:$0xff pattern:$0x75316420]
        %v594 = vld.sshfl [vmem:[#allocation1 + $0x8] sm:$0xff pattern:$0x75316420]
        %595 = vrot.lane.b32.xlu0 %v593, 112
        %v596 = vpop.permute.xlu0 %595
        %597 = vrot.lane.b32.xlu0 %v594, 112
        %v598 = vpop.permute.xlu0 %597
        %vm599 = vcmask 916480
        %v600 = vsel %vm599, %v596, %v598
        %v603 = vsel %vm599, %v598, 0.0
        %v604 = vperm.slane %v478, 7
        %v605 = vperm.slane %v479, 7
        %v606 = vmul.f32 %v600, %v604
        %v607 = vmul.f32 %v603, %v605
        %608 = vst [vmem:[#allocation1] ss:$2 sm:$0xff] %v477
        %v609 = vld.sshfl [vmem:[#allocation1] sm:$0xff pattern:$0x75316420]
        %v610 = vld.sshfl [vmem:[#allocation1 + $0x8] sm:$0xff pattern:$0x75316420]
        %611 = vrot.lane.b32.xlu0 %v609, 111
        %v612 = vpop.permute.xlu0 %611
        %613 = vrot.lane.b32.xlu0 %v610, 111
        %v614 = vpop.permute.xlu0 %613
        %vm615 = vcmask 908288
        %v616 = vsel %vm615, %v612, %v614
        %v619 = vsel %vm615, %v614, 0.0
        %v620 = vperm.slane %v480, 0
        %v621 = vperm.slane %v481, 0
        %v622 = vmul.f32 %v616, %v620
        %v623 = vmul.f32 %v619, %v621
        %v626 = vrot.slane %v517, 5
        %v627 = vrot.slane %v518, 5
        %v632 = vrot.slane %v533, 2
        %v633 = vrot.slane %v534, 2
        %v638 = vrot.slane %v549, 7
        %v639 = vrot.slane %v550, 7
        %s643 = scalar_lea.vmem [#allocation1], 1
        %644 = vst [vmem:[%s643] ss:$2 sm:$0xff] %v559
        %v645 = vld.sshfl [vmem:[#allocation1] sm:$0xff pattern:$0x75316420]
        %v646 = vld.sshfl [vmem:[#allocation1 + $0x8] sm:$0xff pattern:$0x75316420]
        %v651 = vrot.slane %v574, 1
        %v652 = vrot.slane %v575, 1
        %v657 = vrot.slane %v590, 6
        %v658 = vrot.slane %v591, 6
        %v663 = vrot.slane %v606, 3
        %v664 = vrot.slane %v607, 3
        %vm667 = vcmask 1042432
        %v668 = vsel %vm667, %v501, %v626
        %v669 = vsel %vm667, %v502, %v627
        %vm670 = vcmask 1045504
        %v671 = vsel %vm670, %v668, %v632
        %v672 = vsel %vm670, %v669, %v633
        %vm673 = vcmask 1040384
        %v674 = vsel %vm673, %v632, %v638
        %v675 = vsel %vm673, %v633, %v639
        %v676 = vsel %vm556, %v674, %v645
        %v677 = vsel %vm556, %v675, %v646
        %vm678 = vcmask 1046528
        %v679 = vsel %vm678, %v676, %v651
        %v680 = vsel %vm678, %v677, %v652
        %vm681 = vcmask 1041408
        %v682 = vsel %vm681, %v651, %v657
        %v683 = vsel %vm681, %v652, %v658
        %vm684 = vcmask 1044480
        %v685 = vsel %vm684, %v682, %v663
        %v686 = vsel %vm684, %v683, %v664
        %688 = vset.pattern.permute.xlu0 0
        %689 = vperm.xlu0 %688, %v485
        %v690 = vpop.permute.xlu0 %689
        %vm692 = vcmask 220160
        %v694 = vsel %vm692, %v484, 0
        %v697 = vsel %vm667, %v622, 0
        %v700 = vsel %vm667, %v623, 0
        %702 = vmatpush.msra.mxu0 0.0
        %703 = vmatpush.msra.mxu0 0.0
        %704 = vmatpush.msra.mxu0 0.0
        %705 = vmatpush.msra.mxu0 0.0
        %706 = vmatpush.msra.mxu0 0.0
        %707 = vmatpush.msra.mxu0 0.0
        %708 = vmatpush.msra.mxu0 0.0
        %709 = vmatpush.msra.mxu0 0.0
        %710 = vmatpush.msra.mxu0 0.0
        %711 = vmatpush.msra.mxu0 0.0
        %712 = vmatpush.msra.mxu0 0.0
        %713 = vmatpush.msra.mxu0 0.0
        %714 = vmatpush.msra.mxu0 %v697
        %715 = vmatpush.msra.mxu0 %v685
        %716 = vmatpush.msra.mxu0 %v679
        %717 = vmatpush.msra.mxu0 %v671
        %718 = vmatmul.f32.gmra.mxu0 %v694
        %v719 = vpop.f32.mrf.mxu0
        %v720 = vadd.f32 %v690, %v719
        %721 = vdwg.mxu0
        %722 = vmatpush.msra.mxu0 0.0
        %723 = vmatpush.msra.mxu0 0.0
        %724 = vmatpush.msra.mxu0 0.0
        %725 = vmatpush.msra.mxu0 0.0
        %726 = vmatpush.msra.mxu0 0.0
        %727 = vmatpush.msra.mxu0 0.0
        %728 = vmatpush.msra.mxu0 0.0
        %729 = vmatpush.msra.mxu0 0.0
        %730 = vmatpush.msra.mxu0 0.0
        %731 = vmatpush.msra.mxu0 0.0
        %732 = vmatpush.msra.mxu0 0.0
        %733 = vmatpush.msra.mxu0 0.0
        %734 = vmatpush.msra.mxu0 %v700
        %735 = vmatpush.msra.mxu0 %v686
        %736 = vmatpush.msra.mxu0 %v680
        %737 = vmatpush.msra.mxu0 %v672
        %738 = vmatmul.f32.gmra.mxu0 %v694
        %v739 = vpop.f32.mrf.mxu0
        %v740 = vadd.f32 %v690, %v739
        %741 = vdwg.mxu0
        %v742 = vmax.f32 %v720, 0.0
        %v743 = vmax.f32 %v740, 0.0
        %746 = vrot.lane.b32.xlu0 %v742, 127
        %v747 = vpop.permute.xlu0 %746
        %748 = vrot.lane.b32.xlu0 %v743, 127
        %v749 = vpop.permute.xlu0 %748
        %v750 = vsel %vm567, %v747, %v749
        %v753 = vsel %vm567, %v749, 0.0
        %v754 = vmax.f32 %v742, %v750
        %v755 = vmax.f32 %v743, %v753
        %758 = vrot.lane.b32.xlu0 %v754, 112
        %v759 = vpop.permute.xlu0 %758
        %760 = vrot.lane.b32.xlu0 %v755, 112
        %v761 = vpop.permute.xlu0 %760
        %v762 = vsel %vm599, %v759, %v761
        %v765 = vsel %vm599, %v761, 0.0
        %v766 = vmax.f32 %v754, %v762
        %v767 = vmax.f32 %v755, %v765
        %v768 = vld [vmem:[%s3] sm:$0xff]
        %v769 = vld [vmem:[%s3 + $0x8] sm:$0xff]
        %v770 = vld [vmem:[%s3 + $0x10] sm:$0xff]
        %v771 = vld [vmem:[%s3 + $0x18] sm:$0xff]
        %v772 = vld [vmem:[%s3 + $0x20] sm:$0xff]
        %v773 = vld [vmem:[%s3 + $0x28] sm:$0xff]
        %v774 = vld [vmem:[%s3 + $0x30] sm:$0xff]
        %v775 = vld [vmem:[%s3 + $0x38] sm:$0xff]
        %v776 = vld [vmem:[%s3 + $0x40] sm:$0xff]
        %v777 = vld [vmem:[%s3 + $0x48] sm:$0xff]
        %v778 = vld [vmem:[%s3 + $0x50] sm:$0xff]
        %v779 = vld [vmem:[%s3 + $0x58] sm:$0xff]
        %v780 = vld [vmem:[%s3 + $0x60] sm:$0xff]
        %v781 = vld [vmem:[%s3 + $0x68] sm:$0xff]
        %v782 = vld [vmem:[%s3 + $0x70] sm:$0xff]
        %v783 = vld [vmem:[%s3 + $0x78] sm:$0xff]
        %v784 = vld [vmem:[%s3 + $0x80] sm:$0xff]
        %v785 = vld [vmem:[%s3 + $0x88] sm:$0xff]
        %v786 = vld [vmem:[%s3 + $0x90] sm:$0xff]
        %v787 = vld [vmem:[%s3 + $0x98] sm:$0xff]
        %v788 = vld [vmem:[%s3 + $0xa0] sm:$0xff]
        %v789 = vld [vmem:[%s3 + $0xa8] sm:$0xff]
        %v790 = vld [vmem:[%s3 + $0xb0] sm:$0xff]
        %v791 = vld [vmem:[%s3 + $0xb8] sm:$0xff]
        %v792 = vld [vmem:[%s3 + $0xc0] sm:$0xff]
        %v793 = vld [vmem:[%s3 + $0xc8] sm:$0xff]
        %v794 = vld [vmem:[%s3 + $0xd0] sm:$0xff]
        %v795 = vld [vmem:[%s3 + $0xd8] sm:$0xff]
        %v796 = vld [vmem:[%s3 + $0xe0] sm:$0xff]
        %v797 = vld [vmem:[%s3 + $0xe8] sm:$0xff]
        %v798 = vld [vmem:[%s3 + $0xf0] sm:$0xff]
        %v799 = vld [vmem:[%s3 + $0xf8] sm:$0xff]
        %800 = vmatpush.msra.mxu0 %v783
        %801 = vmatpush.msra.mxu0 %v782
        %802 = vmatpush.msra.mxu0 %v781
        %803 = vmatpush.msra.mxu0 %v780
        %804 = vmatpush.msra.mxu0 %v779
        %805 = vmatpush.msra.mxu0 %v778
        %806 = vmatpush.msra.mxu0 %v777
        %807 = vmatpush.msra.mxu0 %v776
        %808 = vmatpush.msra.mxu0 %v775
        %809 = vmatpush.msra.mxu0 %v774
        %810 = vmatpush.msra.mxu0 %v773
        %811 = vmatpush.msra.mxu0 %v772
        %812 = vmatpush.msra.mxu0 %v771
        %813 = vmatpush.msra.mxu0 %v770
        %814 = vmatpush.msra.mxu0 %v769
        %815 = vmatpush.msra.mxu0 %v768
        %816 = vmatmul.f32.gmra.mxu0 %v766
        %v817 = vpop.f32.mrf.mxu0
        %v818 = vadd.f32 0.0, %v817
        %819 = vdwg.mxu0
        %820 = vmatpush.msra.mxu0 %v799
        %821 = vmatpush.msra.mxu0 %v798
        %822 = vmatpush.msra.mxu0 %v797
        %823 = vmatpush.msra.mxu0 %v796
        %824 = vmatpush.msra.mxu0 %v795
        %825 = vmatpush.msra.mxu0 %v794
        %826 = vmatpush.msra.mxu0 %v793
        %827 = vmatpush.msra.mxu0 %v792
        %828 = vmatpush.msra.mxu0 %v791
        %829 = vmatpush.msra.mxu0 %v790
        %830 = vmatpush.msra.mxu0 %v789
        %831 = vmatpush.msra.mxu0 %v788
        %832 = vmatpush.msra.mxu0 %v787
        %833 = vmatpush.msra.mxu0 %v786
        %834 = vmatpush.msra.mxu0 %v785
        %835 = vmatpush.msra.mxu0 %v784
        %836 = vmatmul.f32.gmra.mxu0 %v767
        %v837 = vpop.f32.mrf.mxu0
        %v838 = vadd.f32 %v818, %v837
        %839 = vdwg.mxu0
        %v840 = vld [vmem:[%s7] sm:$0xff]
        %v841 = vld [vmem:[%s7 + $0x8] sm:$0xff]
        %v842 = vld [vmem:[%s8] sm:$0xff]
        %v843 = vld [vmem:[%s8 + $0x8] sm:$0xff]
        %845 = vrot.lane.b32.xlu0 %v838, 9
        %v846 = vpop.permute.xlu0 %845
        %vm848 = vcmask 72704
        %v849 = vsel %vm848, 0.0, %v846
        %v850 = vperm.slane %v482, 0
        %v851 = vmul.f32 %v849, %v850
        %852 = vrot.lane.b32.xlu0 %v838, 8
        %v853 = vpop.permute.xlu0 %852
        %vm855 = vcmask 64512
        %v856 = vsel %vm855, 0.0, %v853
        %v857 = vperm.slane %v482, 1
        %v858 = vmul.f32 %v856, %v857
        %859 = vrot.lane.b32.xlu0 %v838, 7
        %v860 = vpop.permute.xlu0 %859
        %vm862 = vcmask 56320
        %v863 = vsel %vm862, 0.0, %v860
        %v864 = vperm.slane %v482, 2
        %v865 = vmul.f32 %v863, %v864
        %866 = vrot.lane.b32.xlu0 %v838, 1
        %v867 = vpop.permute.xlu0 %866
        %v869 = vsel %vm542, 0.0, %v867
        %v870 = vperm.slane %v482, 3
        %v871 = vmul.f32 %v869, %v870
        %v872 = vperm.slane %v482, 4
        %v873 = vmul.f32 %v838, %v872
        %874 = vrot.lane.b32.xlu0 %v838, 127
        %v875 = vpop.permute.xlu0 %874
        %vm877 = vcmask 515072
        %v878 = vsel %vm877, %v875, 0.0
        %v879 = vperm.slane %v482, 5
        %v880 = vmul.f32 %v878, %v879
        %881 = vrot.lane.b32.xlu0 %v838, 121
        %v882 = vpop.permute.xlu0 %881
        %vm884 = vcmask 465920
        %v885 = vsel %vm884, %v882, 0.0
        %v886 = vperm.slane %v482, 6
        %v887 = vmul.f32 %v885, %v886
        %888 = vrot.lane.b32.xlu0 %v838, 120
        %v889 = vpop.permute.xlu0 %888
        %vm891 = vcmask 457728
        %v892 = vsel %vm891, %v889, 0.0
        %v893 = vperm.slane %v482, 7
        %v894 = vmul.f32 %v892, %v893
        %895 = vrot.lane.b32.xlu0 %v838, 119
        %v896 = vpop.permute.xlu0 %895
        %vm898 = vcmask 449536
        %v899 = vsel %vm898, %v896, 0.0
        %v900 = vperm.slane %v483, 0
        %v901 = vmul.f32 %v899, %v900
        %903 = vset.pattern.permute.xlu0 0
        %904 = vperm.xlu0 %903, %v842
        %v905 = vpop.permute.xlu0 %904
        %908 = vset.pattern.permute.xlu0 0
        %909 = vperm.xlu0 %908, %v843
        %v910 = vpop.permute.xlu0 %909
        %vm912 = vcmask 588800
        %v914 = vsel %vm912, %v840, 0
        %v917 = vsel %vm912, %v841, 0
        %919 = vmatpush.msra.mxu0 0.0
        %920 = vmatpush.msra.mxu0 0.0
        %921 = vmatpush.msra.mxu0 0.0
        %922 = vmatpush.msra.mxu0 0.0
        %923 = vmatpush.msra.mxu0 0.0
        %924 = vmatpush.msra.mxu0 0.0
        %925 = vmatpush.msra.mxu0 0.0
        %926 = vmatpush.msra.mxu0 %v901
        %927 = vmatpush.msra.mxu0 %v894
        %928 = vmatpush.msra.mxu0 %v887
        %929 = vmatpush.msra.mxu0 %v880
        %930 = vmatpush.msra.mxu0 %v873
        %931 = vmatpush.msra.mxu0 %v871
        %932 = vmatpush.msra.mxu0 %v865
        %933 = vmatpush.msra.mxu0 %v858
        %934 = vmatpush.msra.mxu0 %v851
        %935 = vmatmul.f32.gmra.mxu0 %v914
        %v936 = vpop.f32.mrf.mxu0
        %v937 = vadd.f32 %v905, %v936
        %938 = vmatmul.f32.gmra.mxu0 %v917
        %v939 = vpop.f32.mrf.mxu0
        %v940 = vadd.f32 %v910, %v939
        %941 = vdwg.mxu0
        %v942 = vmax.f32 %v937, 0.0
        %v943 = vmax.f32 %v940, 0.0
        %v944 = vld [vmem:[%s4] sm:$0xff]
        %v945 = vld [vmem:[%s4 + $0x8] sm:$0xff]
        %v946 = vld [vmem:[%s4 + $0x10] sm:$0xff]
        %v947 = vld [vmem:[%s4 + $0x18] sm:$0xff]
        %v948 = vld [vmem:[%s4 + $0x20] sm:$0xff]
        %v949 = vld [vmem:[%s4 + $0x28] sm:$0xff]
        %v950 = vld [vmem:[%s4 + $0x30] sm:$0xff]
        %v951 = vld [vmem:[%s4 + $0x38] sm:$0xff]
        %v952 = vld [vmem:[%s4 + $0x40] sm:$0xff]
        %v953 = vld [vmem:[%s4 + $0x48] sm:$0xff]
        %v954 = vld [vmem:[%s4 + $0x50] sm:$0xff]
        %v955 = vld [vmem:[%s4 + $0x58] sm:$0xff]
        %v956 = vld [vmem:[%s4 + $0x60] sm:$0xff]
        %v957 = vld [vmem:[%s4 + $0x68] sm:$0xff]
        %v958 = vld [vmem:[%s4 + $0x70] sm:$0xff]
        %v959 = vld [vmem:[%s4 + $0x78] sm:$0xff]
        %vm960 = vcmask 523264
        %v962 = vsel %vm960, %v942, 0
        %v965 = vsel %vm960, %v943, 0
        %967 = vmatpush.msra.mxu0 0.0
        %968 = vmatpush.msra.mxu0 0.0
        %969 = vmatpush.msra.mxu0 0.0
        %970 = vmatpush.msra.mxu0 0.0
        %971 = vmatpush.msra.mxu0 0.0
        %972 = vmatpush.msra.mxu0 0.0
        %973 = vmatpush.msra.mxu0 0.0
        %974 = vmatpush.msra.mxu0 0.0
        %975 = vmatpush.msra.mxu0 %v958
        %976 = vmatpush.msra.mxu0 %v956
        %977 = vmatpush.msra.mxu0 %v954
        %978 = vmatpush.msra.mxu0 %v952
        %979 = vmatpush.msra.mxu0 %v950
        %980 = vmatpush.msra.mxu0 %v948
        %981 = vmatpush.msra.mxu0 %v946
        %982 = vmatpush.msra.mxu0 %v944
        %983 = vmatmul.f32.gmra.mxu0 %v962
        %v984 = vpop.f32.mrf.mxu0
        %v985 = vadd.f32 0.0, %v984
        %986 = vmatmul.f32.gmra.mxu0 %v965
        %v987 = vpop.f32.mrf.mxu0
        %v988 = vadd.f32 0.0, %v987
        %989 = vdwg.mxu0
        %990 = vmatpush.msra.mxu0 0.0
        %991 = vmatpush.msra.mxu0 0.0
        %992 = vmatpush.msra.mxu0 0.0
        %993 = vmatpush.msra.mxu0 0.0
        %994 = vmatpush.msra.mxu0 0.0
        %995 = vmatpush.msra.mxu0 0.0
        %996 = vmatpush.msra.mxu0 0.0
        %997 = vmatpush.msra.mxu0 0.0
        %998 = vmatpush.msra.mxu0 %v959
        %999 = vmatpush.msra.mxu0 %v957
        %1000 = vmatpush.msra.mxu0 %v955
        %1001 = vmatpush.msra.mxu0 %v953
        %1002 = vmatpush.msra.mxu0 %v951
        %1003 = vmatpush.msra.mxu0 %v949
        %1004 = vmatpush.msra.mxu0 %v947
        %1005 = vmatpush.msra.mxu0 %v945
        %1006 = vmatmul.f32.gmra.mxu0 %v962
        %v1007 = vpop.f32.mrf.mxu0
        %v1008 = vadd.f32 0.0, %v1007
        %1009 = vmatmul.f32.gmra.mxu0 %v965
        %v1010 = vpop.f32.mrf.mxu0
        %v1011 = vadd.f32 0.0, %v1010
        %1012 = vdwg.mxu0
        %v1013 = vld [vmem:[%s9] sm:$0xff]
        %v1014 = vld [vmem:[%s9 + $0x8] sm:$0xff]
        %v1015 = vld [vmem:[%s10] sm:$0xff]
        %1020 = vrot.lane.b32.xlu0 %v985, 17
        %v1021 = vpop.permute.xlu0 %1020
        %1022 = vrot.lane.b32.xlu0 %v1008, 17
        %v1023 = vpop.permute.xlu0 %1022
        %1024 = vrot.lane.b32.xlu0 %v988, 17
        %v1025 = vpop.permute.xlu0 %1024
        %1026 = vrot.lane.b32.xlu0 %v1011, 17
        %v1027 = vpop.permute.xlu0 %1026
        %1028 = vrot.lane.b32.xlu0 %v742, 17
        %v1029 = vpop.permute.xlu0 %1028
        %1030 = vrot.lane.b32.xlu0 %v743, 17
        %v1031 = vpop.permute.xlu0 %1030
        %v1032 = vsel %vm494, %v1021, %v1023
        %v1033 = vsel %vm494, %v1025, %v1027
        %v1034 = vsel %vm494, %v1029, %v1031
        %v1041 = vsel %vm494, 0.0, %v1021
        %v1042 = vsel %vm494, 0.0, %v1025
        %v1043 = vsel %vm494, 0.0, %v1029
        %v1044 = vmul.f32 %v1041, %v499
        %v1045 = vmul.f32 %v1032, %v500
        %v1046 = vmul.f32 %v1042, %v499
        %v1047 = vmul.f32 %v1033, %v500
        %v1048 = vmul.f32 %v1043, %v499
        %v1049 = vmul.f32 %v1034, %v500
        %1050 = vrot.lane.b32.xlu0 %v985, 16
        %v1051 = vpop.permute.xlu0 %1050
        %1052 = vrot.lane.b32.xlu0 %v1008, 16
        %v1053 = vpop.permute.xlu0 %1052
        %1054 = vrot.lane.b32.xlu0 %v988, 16
        %v1055 = vpop.permute.xlu0 %1054
        %1056 = vrot.lane.b32.xlu0 %v1011, 16
        %v1057 = vpop.permute.xlu0 %1056
        %1058 = vrot.lane.b32.xlu0 %v742, 16
        %v1059 = vpop.permute.xlu0 %1058
        %1060 = vrot.lane.b32.xlu0 %v743, 16
        %v1061 = vpop.permute.xlu0 %1060
        %v1062 = vsel %vm510, %v1051, %v1053
        %v1063 = vsel %vm510, %v1055, %v1057
        %v1064 = vsel %vm510, %v1059, %v1061
        %v1071 = vsel %vm510, 0.0, %v1051
        %v1072 = vsel %vm510, 0.0, %v1055
        %v1073 = vsel %vm510, 0.0, %v1059
        %v1074 = vmul.f32 %v1071, %v515
        %v1075 = vmul.f32 %v1062, %v516
        %v1076 = vmul.f32 %v1072, %v515
        %v1077 = vmul.f32 %v1063, %v516
        %v1078 = vmul.f32 %v1073, %v515
        %v1079 = vmul.f32 %v1064, %v516
        %1080 = vrot.lane.b32.xlu0 %v985, 15
        %v1081 = vpop.permute.xlu0 %1080
        %1082 = vrot.lane.b32.xlu0 %v1008, 15
        %v1083 = vpop.permute.xlu0 %1082
        %1084 = vrot.lane.b32.xlu0 %v988, 15
        %v1085 = vpop.permute.xlu0 %1084
        %1086 = vrot.lane.b32.xlu0 %v1011, 15
        %v1087 = vpop.permute.xlu0 %1086
        %1088 = vrot.lane.b32.xlu0 %v742, 15
        %v1089 = vpop.permute.xlu0 %1088
        %1090 = vrot.lane.b32.xlu0 %v743, 15
        %v1091 = vpop.permute.xlu0 %1090
        %v1092 = vsel %vm526, %v1081, %v1083
        %v1093 = vsel %vm526, %v1085, %v1087
        %v1094 = vsel %vm526, %v1089, %v1091
        %v1101 = vsel %vm526, 0.0, %v1081
        %v1102 = vsel %vm526, 0.0, %v1085
        %v1103 = vsel %vm526, 0.0, %v1089
        %v1104 = vmul.f32 %v1101, %v531
        %v1105 = vmul.f32 %v1092, %v532
        %v1106 = vmul.f32 %v1102, %v531
        %v1107 = vmul.f32 %v1093, %v532
        %v1108 = vmul.f32 %v1103, %v531
        %v1109 = vmul.f32 %v1094, %v532
        %1110 = vrot.lane.b32.xlu0 %v985, 1
        %v1111 = vpop.permute.xlu0 %1110
        %1112 = vrot.lane.b32.xlu0 %v1008, 1
        %v1113 = vpop.permute.xlu0 %1112
        %1114 = vrot.lane.b32.xlu0 %v988, 1
        %v1115 = vpop.permute.xlu0 %1114
        %1116 = vrot.lane.b32.xlu0 %v1011, 1
        %v1117 = vpop.permute.xlu0 %1116
        %1118 = vrot.lane.b32.xlu0 %v742, 1
        %v1119 = vpop.permute.xlu0 %1118
        %1120 = vrot.lane.b32.xlu0 %v743, 1
        %v1121 = vpop.permute.xlu0 %1120
        %v1122 = vsel %vm542, %v1111, %v1113
        %v1123 = vsel %vm542, %v1115, %v1117
        %v1124 = vsel %vm542, %v1119, %v1121
        %v1131 = vsel %vm542, 0.0, %v1111
        %v1132 = vsel %vm542, 0.0, %v1115
        %v1133 = vsel %vm542, 0.0, %v1119
        %v1134 = vmul.f32 %v1131, %v547
        %v1135 = vmul.f32 %v1122, %v548
        %v1136 = vmul.f32 %v1132, %v547
        %v1137 = vmul.f32 %v1123, %v548
        %v1138 = vmul.f32 %v1133, %v547
        %v1139 = vmul.f32 %v1124, %v548
        %v1140 = vmul.f32 %v985, %v551
        %v1141 = vmul.f32 %v1008, %v552
        %v1142 = vmul.f32 %v988, %v551
        %v1143 = vmul.f32 %v1011, %v552
        %v1144 = vmul.f32 %v742, %v551
        %v1145 = vmul.f32 %v743, %v552
        %1146 = vrot.lane.b32.xlu0 %v985, 127
        %v1147 = vpop.permute.xlu0 %1146
        %1148 = vrot.lane.b32.xlu0 %v1008, 127
        %v1149 = vpop.permute.xlu0 %1148
        %1150 = vrot.lane.b32.xlu0 %v988, 127
        %v1151 = vpop.permute.xlu0 %1150
        %1152 = vrot.lane.b32.xlu0 %v1011, 127
        %v1153 = vpop.permute.xlu0 %1152
        %v1154 = vsel %vm567, %v1147, %v1149
        %v1155 = vsel %vm567, %v1151, %v1153
        %v1160 = vsel %vm567, %v1149, 0.0
        %v1161 = vsel %vm567, %v1153, 0.0
        %v1162 = vmul.f32 %v1154, %v572
        %v1163 = vmul.f32 %v1160, %v573
        %v1164 = vmul.f32 %v1155, %v572
        %v1165 = vmul.f32 %v1161, %v573
        %v1166 = vmul.f32 %v750, %v572
        %v1167 = vmul.f32 %v753, %v573
        %1168 = vrot.lane.b32.xlu0 %v985, 113
        %v1169 = vpop.permute.xlu0 %1168
        %1170 = vrot.lane.b32.xlu0 %v1008, 113
        %v1171 = vpop.permute.xlu0 %1170
        %1172 = vrot.lane.b32.xlu0 %v988, 113
        %v1173 = vpop.permute.xlu0 %1172
        %1174 = vrot.lane.b32.xlu0 %v1011, 113
        %v1175 = vpop.permute.xlu0 %1174
        %1176 = vrot.lane.b32.xlu0 %v742, 113
        %v1177 = vpop.permute.xlu0 %1176
        %1178 = vrot.lane.b32.xlu0 %v743, 113
        %v1179 = vpop.permute.xlu0 %1178
        %v1180 = vsel %vm583, %v1169, %v1171
        %v1181 = vsel %vm583, %v1173, %v1175
        %v1182 = vsel %vm583, %v1177, %v1179
        %v1189 = vsel %vm583, %v1171, 0.0
        %v1190 = vsel %vm583, %v1175, 0.0
        %v1191 = vsel %vm583, %v1179, 0.0
        %v1192 = vmul.f32 %v1180, %v588
        %v1193 = vmul.f32 %v1189, %v589
        %v1194 = vmul.f32 %v1181, %v588
        %v1195 = vmul.f32 %v1190, %v589
        %v1196 = vmul.f32 %v1182, %v588
        %v1197 = vmul.f32 %v1191, %v589
        %1198 = vrot.lane.b32.xlu0 %v985, 112
        %v1199 = vpop.permute.xlu0 %1198
        %1200 = vrot.lane.b32.xlu0 %v1008, 112
        %v1201 = vpop.permute.xlu0 %1200
        %1202 = vrot.lane.b32.xlu0 %v988, 112
        %v1203 = vpop.permute.xlu0 %1202
        %1204 = vrot.lane.b32.xlu0 %v1011, 112
        %v1205 = vpop.permute.xlu0 %1204
        %1206 = vrot.lane.b32.xlu0 %v742, 112
        %v1207 = vpop.permute.xlu0 %1206
        %1208 = vrot.lane.b32.xlu0 %v743, 112
        %v1209 = vpop.permute.xlu0 %1208
        %v1210 = vsel %vm599, %v1199, %v1201
        %v1211 = vsel %vm599, %v1203, %v1205
        %v1212 = vsel %vm599, %v1207, %v1209
        %v1219 = vsel %vm599, %v1201, 0.0
        %v1220 = vsel %vm599, %v1205, 0.0
        %v1221 = vsel %vm599, %v1209, 0.0
        %v1222 = vmul.f32 %v1210, %v604
        %v1223 = vmul.f32 %v1219, %v605
        %v1224 = vmul.f32 %v1211, %v604
        %v1225 = vmul.f32 %v1220, %v605
        %v1226 = vmul.f32 %v1212, %v604
        %v1227 = vmul.f32 %v1221, %v605
        %1228 = vrot.lane.b32.xlu0 %v985, 111
        %v1229 = vpop.permute.xlu0 %1228
        %1230 = vrot.lane.b32.xlu0 %v1008, 111
        %v1231 = vpop.permute.xlu0 %1230
        %1232 = vrot.lane.b32.xlu0 %v988, 111
        %v1233 = vpop.permute.xlu0 %1232
        %1234 = vrot.lane.b32.xlu0 %v1011, 111
        %v1235 = vpop.permute.xlu0 %1234
        %1236 = vrot.lane.b32.xlu0 %v742, 111
        %v1237 = vpop.permute.xlu0 %1236
        %1238 = vrot.lane.b32.xlu0 %v743, 111
        %v1239 = vpop.permute.xlu0 %1238
        %v1240 = vsel %vm615, %v1229, %v1231
        %v1241 = vsel %vm615, %v1233, %v1235
        %v1242 = vsel %vm615, %v1237, %v1239
        %v1249 = vsel %vm615, %v1231, 0.0
        %v1250 = vsel %vm615, %v1235, 0.0
        %v1251 = vsel %vm615, %v1239, 0.0
        %v1252 = vmul.f32 %v1240, %v620
        %v1253 = vmul.f32 %v1249, %v621
        %v1254 = vmul.f32 %v1241, %v620
        %v1255 = vmul.f32 %v1250, %v621
        %v1256 = vmul.f32 %v1242, %v620
        %v1257 = vmul.f32 %v1251, %v621
        %1259 = vset.pattern.permute.xlu0 0
        %1260 = vperm.xlu0 %1259, %v1015
        %v1261 = vpop.permute.xlu0 %1260
        %vm1263 = vcmask 719872
        %v1265 = vsel %vm1263, %v1014, 0
        %1267 = vmatpush.msra.mxu0 %v1162
        %1268 = vmatpush.msra.mxu0 %v1144
        %1269 = vmatpush.msra.mxu0 %v1142
        %1270 = vmatpush.msra.mxu0 %v1140
        %1271 = vmatpush.msra.mxu0 %v1138
        %1272 = vmatpush.msra.mxu0 %v1136
        %1273 = vmatpush.msra.mxu0 %v1134
        %1274 = vmatpush.msra.mxu0 %v1108
        %1275 = vmatpush.msra.mxu0 %v1106
        %1276 = vmatpush.msra.mxu0 %v1104
        %1277 = vmatpush.msra.mxu0 %v1078
        %1278 = vmatpush.msra.mxu0 %v1076
        %1279 = vmatpush.msra.mxu0 %v1074
        %1280 = vmatpush.msra.mxu0 %v1048
        %1281 = vmatpush.msra.mxu0 %v1046
        %1282 = vmatpush.msra.mxu0 %v1044
        %1283 = vmatmul.f32.gmra.mxu0 %v1013
        %v1284 = vpop.f32.mrf.mxu0
        %v1285 = vadd.f32 %v1261, %v1284
        %1286 = vdwg.mxu0
        %1287 = vmatpush.msra.mxu0 0.0
        %1288 = vmatpush.msra.mxu0 0.0
        %1289 = vmatpush.msra.mxu0 0.0
        %1290 = vmatpush.msra.mxu0 0.0
        %1291 = vmatpush.msra.mxu0 0.0
        %1292 = vmatpush.msra.mxu0 %v1256
        %1293 = vmatpush.msra.mxu0 %v1254
        %1294 = vmatpush.msra.mxu0 %v1252
        %1295 = vmatpush.msra.mxu0 %v1226
        %1296 = vmatpush.msra.mxu0 %v1224
        %1297 = vmatpush.msra.mxu0 %v1222
        %1298 = vmatpush.msra.mxu0 %v1196
        %1299 = vmatpush.msra.mxu0 %v1194
        %1300 = vmatpush.msra.mxu0 %v1192
        %1301 = vmatpush.msra.mxu0 %v1166
        %1302 = vmatpush.msra.mxu0 %v1164
        %1303 = vmatmul.f32.gmra.mxu0 %v1265
        %v1304 = vpop.f32.mrf.mxu0
        %v1305 = vadd.f32 %v1285, %v1304
        %1306 = vdwg.mxu0
        %1307 = vmatpush.msra.mxu0 %v1163
        %1308 = vmatpush.msra.mxu0 %v1145
        %1309 = vmatpush.msra.mxu0 %v1143
        %1310 = vmatpush.msra.mxu0 %v1141
        %1311 = vmatpush.msra.mxu0 %v1139
        %1312 = vmatpush.msra.mxu0 %v1137
        %1313 = vmatpush.msra.mxu0 %v1135
        %1314 = vmatpush.msra.mxu0 %v1109
        %1315 = vmatpush.msra.mxu0 %v1107
        %1316 = vmatpush.msra.mxu0 %v1105
        %1317 = vmatpush.msra.mxu0 %v1079
        %1318 = vmatpush.msra.mxu0 %v1077
        %1319 = vmatpush.msra.mxu0 %v1075
        %1320 = vmatpush.msra.mxu0 %v1049
        %1321 = vmatpush.msra.mxu0 %v1047
        %1322 = vmatpush.msra.mxu0 %v1045
        %1323 = vmatmul.f32.gmra.mxu0 %v1013
        %v1324 = vpop.f32.mrf.mxu0
        %v1325 = vadd.f32 %v1261, %v1324
        %1326 = vdwg.mxu0
        %1327 = vmatpush.msra.mxu0 0.0
        %1328 = vmatpush.msra.mxu0 0.0
        %1329 = vmatpush.msra.mxu0 0.0
        %1330 = vmatpush.msra.mxu0 0.0
        %1331 = vmatpush.msra.mxu0 0.0
        %1332 = vmatpush.msra.mxu0 %v1257
        %1333 = vmatpush.msra.mxu0 %v1255
        %1334 = vmatpush.msra.mxu0 %v1253
        %1335 = vmatpush.msra.mxu0 %v1227
        %1336 = vmatpush.msra.mxu0 %v1225
        %1337 = vmatpush.msra.mxu0 %v1223
        %1338 = vmatpush.msra.mxu0 %v1197
        %1339 = vmatpush.msra.mxu0 %v1195
        %1340 = vmatpush.msra.mxu0 %v1193
        %1341 = vmatpush.msra.mxu0 %v1167
        %1342 = vmatpush.msra.mxu0 %v1165
        %1343 = vmatmul.f32.gmra.mxu0 %v1265
        %v1344 = vpop.f32.mrf.mxu0
        %v1345 = vadd.f32 %v1325, %v1344
        %1346 = vdwg.mxu0
        %v1347 = vmax.f32 %v1305, 0.0
        %v1348 = vmax.f32 %v1345, 0.0
        %v1349 = vld [vmem:[%s11] sm:$0x3]
        %v1350 = vld [vmem:[%s12] sm:$0x3]
        %1352 = vset.pattern.permute.xlu0 0
        %1353 = vperm.xlu0 %1352, %v1350
        %v1354 = vpop.permute.xlu0 %1353
        %v1357 = vsel %vm855, %v1349, 0
        %1359 = vmatpush.msra.mxu0 0.0
        %1360 = vmatpush.msra.mxu0 0.0
        %1361 = vmatpush.msra.mxu0 0.0
        %1362 = vmatpush.msra.mxu0 0.0
        %1363 = vmatpush.msra.mxu0 0.0
        %1364 = vmatpush.msra.mxu0 0.0
        %1365 = vmatpush.msra.mxu0 0.0
        %1366 = vmatpush.msra.mxu0 0.0
        %1367 = vmatpush.msra.mxu0 0.0
        %1368 = vmatpush.msra.mxu0 0.0
        %1369 = vmatpush.msra.mxu0 0.0
        %1370 = vmatpush.msra.mxu0 0.0
        %1371 = vmatpush.msra.mxu0 0.0
        %1372 = vmatpush.msra.mxu0 0.0
        %1373 = vmatpush.msra.mxu0 0.0
        %1374 = vmatpush.msra.mxu0 %v1347
        %1375 = vmatmul.f32.gmra.mxu0 %v1357
        %v1376 = vpop.f32.mrf.mxu0
        %v1377 = vadd.f32 %v1354, %v1376
        %1378 = vdwg.mxu0
        %1379 = vmatpush.msra.mxu0 0.0
        %1380 = vmatpush.msra.mxu0 0.0
        %1381 = vmatpush.msra.mxu0 0.0
        %1382 = vmatpush.msra.mxu0 0.0
        %1383 = vmatpush.msra.mxu0 0.0
        %1384 = vmatpush.msra.mxu0 0.0
        %1385 = vmatpush.msra.mxu0 0.0
        %1386 = vmatpush.msra.mxu0 0.0
        %1387 = vmatpush.msra.mxu0 0.0
        %1388 = vmatpush.msra.mxu0 0.0
        %1389 = vmatpush.msra.mxu0 0.0
        %1390 = vmatpush.msra.mxu0 0.0
        %1391 = vmatpush.msra.mxu0 0.0
        %1392 = vmatpush.msra.mxu0 0.0
        %1393 = vmatpush.msra.mxu0 0.0
        %1394 = vmatpush.msra.mxu0 %v1348
        %1395 = vmatmul.f32.gmra.mxu0 %v1357
        %v1396 = vpop.f32.mrf.mxu0
        %v1397 = vadd.f32 %v1354, %v1396
        %1398 = vdwg.mxu0
        %v1401 = vrot.slane %v1397, 6
        %v1402 = vsel %vm681, %v1377, %v1401
        %1404 = vst [vmem:[%s464] sm:$0xf] %v1402
        %v1405 = vxor.u32 %v1377, 2147483648
        %v1406 = vxor.u32 %v1397, 2147483648
        %v1407 = vmul.f32 %v1405, 1.442695
        %v1408 = vpow.pop %v1407
        %v1409 = vmul.f32 %v1406, 1.442695
        %v1410 = vpow.pop %v1409
        %v1411 = vadd.f32 %v1408, 1.0
        %v1412 = vadd.f32 %v1410, 1.0
        %v1413 = vrcp.pop %v1411
        %v1414 = vmul.f32 %v1411, %v1413
        %v1415 = vsub.f32 1.0, %v1414
        %v1416 = vmul.f32 %v1413, %v1415
        %v1417 = vadd.f32 %v1413, %v1416
        %vm1418 = vweird.f32 %v1411
        %vm1419 = vweird.f32 %v1413
        %vm1420 = vmor %vm1418, %vm1419
        %v1421 = vsel %vm1420, %v1413, %v1417
        %v1422 = vand.u32 2147483647, %v1411
        %vm1423 = vcmp.eq.f32.partialorder %v1422, 8.507059e+37
        %v1424 = vand.u32 %v1411, 2147483648
        %v1425 = vor.u32 1.1754944e-38, %v1424
        %v1426 = vsel %vm1423, %v1425, %v1421
        %v1427 = vmul.f32 1.0, %v1426
        %v1428 = vrcp.pop %v1412
        %v1429 = vmul.f32 %v1412, %v1428
        %v1430 = vsub.f32 1.0, %v1429
        %v1431 = vmul.f32 %v1428, %v1430
        %v1432 = vadd.f32 %v1428, %v1431
        %vm1433 = vweird.f32 %v1412
        %vm1434 = vweird.f32 %v1428
        %vm1435 = vmor %vm1433, %vm1434
        %v1436 = vsel %vm1435, %v1428, %v1432
        %v1437 = vand.u32 2147483647, %v1412
        %vm1438 = vcmp.eq.f32.partialorder %v1437, 8.507059e+37
        %v1439 = vand.u32 %v1412, 2147483648
        %v1440 = vor.u32 1.1754944e-38, %v1439
        %v1441 = vsel %vm1438, %v1440, %v1436
        %v1442 = vmul.f32 1.0, %v1441
        %v1445 = vrot.slane %v1442, 6
        %v1446 = vsel %vm681, %v1427, %v1445
        %1448 = vst [vmem:[%s471] sm:$0xf] %v1446
        %s1449 = sand.u32 %s318, 1
        %s1450 = scalar_lea.sflag [#allocation3], %s1449
        %s1451 = sand.u32 %s318, 1
        %s1452 = smul.addr %s1451, 4
        %s1453 = scalar_lea.vmem [#allocation2], %s1452
        %s1454 = sand.u32 %s344, 1
        %s1455 = scalar_lea.sflag [#allocation5], %s1454
        %s1456 = sand.u32 %s344, 1
        %s1457 = smul.addr %s1456, 4
        %s1458 = scalar_lea.vmem [#allocation4], %s1457
        // Predicated region
        $region73: #{tpu_custom_call.1} parent=71 // pred_check
          %p1459 = pneg %p328
        $region74: #{tpu_custom_call.1} parent=71 // pred_check_branch
          %1461 = sbr.rel (%p1459) target = $region76
        $region75: #{tpu_custom_call.1} parent=71 // pred_region
          %1463 = vsyncadd %s1450, 0
          %s1464 = smul.addr %s32, 2
          %s1465 = smul.addr %s1464, 2
          %s1466 = scalar_lea.hbm %s13, %s1465
          %s1468 = sshll.u32 %s1453, 4
          %s1469 = int_to_ptr.vmem [resolvable:$true] %s1468
          %s1470 = sshll.u32 %s1466, 4
          %s1471 = int_to_ptr.hbm [resolvable:$true] %s1470
          %1473 = dma.vmem_to_hbm [thread:$0]  %s1469, 64, %s1471, %s1450
        $region76: #{tpu_custom_call.1} parent=71 // pred_fallthru
          _
        // Predicated region
        $region77: #{tpu_custom_call.1} parent=71 // pred_check
          %p1474 = pneg %p354
        $region78: #{tpu_custom_call.1} parent=71 // pred_check_branch
          %1476 = sbr.rel (%p1474) target = $region80
        $region79: #{tpu_custom_call.1} parent=71 // pred_region
          %1478 = vsyncadd %s1455, 0
          %s1479 = smul.addr %s32, 2
          %s1480 = smul.addr %s1479, 2
          %s1481 = scalar_lea.hbm %s14, %s1480
          %s1483 = sshll.u32 %s1458, 4
          %s1484 = int_to_ptr.vmem [resolvable:$true] %s1483
          %s1485 = sshll.u32 %s1481, 4
          %s1486 = int_to_ptr.hbm [resolvable:$true] %s1485
          %1488 = dma.vmem_to_hbm [thread:$0]  %s1484, 64, %s1486, %s1455
        $region80: #{tpu_custom_call.1} parent=71 // pred_fallthru
          _
      $region72: #{tpu_custom_call.1} parent=5 // pred_fallthru
        _
      %p1489 = scmp.le.s32.totalorder 2, %s27
      // Predicated region
      $region81: #{tpu_custom_call.1} parent=5 // pred_check
        %p1490 = pneg %p1489
      $region82: #{tpu_custom_call.1} parent=5 // pred_check_branch
        %1492 = sbr.rel (%p1490) target = $region84
      $region83: #{tpu_custom_call.1} parent=5 // pred_region
        %s1493 = ssub.s32 %s27, 2
        // Predicated region
        $region85: #{tpu_custom_call.1} parent=83 // pred_check
          %p1494 = pneg %p334
        $region86: #{tpu_custom_call.1} parent=83 // pred_check_branch
          %1496 = sbr.rel (%p1494) target = $region88
        $region87: #{tpu_custom_call.1} parent=83 // pred_region
          %s1497 = sand.u32 %s319, 1
          %s1498 = scalar_lea.sflag [#allocation3], %s1497
          %s1499 = sand.u32 %s319, 1
          %s1500 = smul.addr %s1499, 4
          %s1501 = scalar_lea.vmem [#allocation2], %s1500
          %1503 = dma.done %s1498, 64
        $region88: #{tpu_custom_call.1} parent=83 // pred_fallthru
          _
        // Predicated region
        $region89: #{tpu_custom_call.1} parent=83 // pred_check
          %p1504 = pneg %p360
        $region90: #{tpu_custom_call.1} parent=83 // pred_check_branch
          %1506 = sbr.rel (%p1504) target = $region92
        $region91: #{tpu_custom_call.1} parent=83 // pred_region
          %s1507 = sand.u32 %s345, 1
          %s1508 = scalar_lea.sflag [#allocation5], %s1507
          %s1509 = sand.u32 %s345, 1
          %s1510 = smul.addr %s1509, 4
          %s1511 = scalar_lea.vmem [#allocation4], %s1510
          %1513 = dma.done %s1508, 64
        $region92: #{tpu_custom_call.1} parent=83 // pred_fallthru
          _
      $region84: #{tpu_custom_call.1} parent=5 // pred_fallthru
        _
    $region6: #{tpu_custom_call.1} parent=1 // loop_footer
      %s31 = sadd.s32 1, %s27
    $region7: #{tpu_custom_call.1} parent=1 // loop_footer_branch
      %26 = sbr.rel target = $region3
    $region8: #{tpu_custom_call.1} parent=1 // loop_exit
      _
    %1514 = vsyncpa [#allocation3], 1
    %s1515 = scalar_lea.sflag [#allocation3], 1
    %1516 = vsyncpa %s1515, 1
    %1517 = vsyncpa [#allocation5], 1
    %s1518 = scalar_lea.sflag [#allocation5], 1
    %1519 = vsyncpa %s1518, 1

</llo_original>
